<compile_context>
chip_gen: v7x
topology: tpu7x:2x2x1
jax: 0.10.0
libtpu: 0.0.40
codegen_flags: <defaults>
</compile_context>

<pallas_src>
import functools

import jax
import jax.numpy as jnp
from jax.experimental import pallas as pl
from jax.experimental.pallas import tpu as pltpu

LRELU_SLOPE = 0.1
NUM_PROC_BLOCKS = 3
DILATIONS = (1, 3, 5)
MAX_DIL = max(DILATIONS)
UP_K, UP_S, UP_P = 4, 2, 1      # ConvTranspose1d kernel / stride / padding
RES_K = 3                       # residual Conv1d kernel size
NUM_STAGES = 4


def _leaky(x):
    return jnp.where(x >= 0, x, LRELU_SLOPE * x)


# ----------------------------- Pallas kernel -------------------------------

def _filter_net_kernel(*refs, chan):
    """Whole FilterNetwork forward for one batch row, in time-folded layout.

    refs = (x0, skip1..skip4, [up_w, up_b, res_w, res_b] x 4 stages, out).
    A length-(2^s*T0) signal is represented as (T0, 2^s*chan) where
    folded[k, p*chan:(p+1)*chan] == signal[2^s*k + p].
    """
    x0_ref = refs[0]
    skip_refs = refs[1:1 + NUM_STAGES]
    par = 1 + NUM_STAGES
    out_ref = refs[-1]

    c = x0_ref[0].astype(jnp.float32)                   # (T0, C), fold factor 1
    t0 = c.shape[0]

    for i in range(NUM_STAGES):
        f = 1 << i                                      # input fold factor
        g = 2 * f                                       # output fold factor
        uw_ref, ub_ref, rw_ref, rb_ref = refs[par + 4 * i: par + 4 * i + 4]

        # ---- LeakyReLU -> ConvTranspose1d(k=4,s=2,p=1) as a polyphase matmul, + bias + skip.
        #  y[2m] = a[m]*W1 + a[m-1]*W3 ;  y[2m+1] = a[m]*W2 + a[m+1]*W0    (a = leaky(x)).
        #  Folded output row k needs samples a[f*k-1 .. f*k+f]; uw is the packed band matrix.
        a = _leaky(c)
        zrow = jnp.zeros((1, f * chan), jnp.float32)
        ap = jnp.concatenate([zrow, a, zrow], axis=0)   # (T0+2, f*C), zero pad one sample/side
        lhs = jnp.concatenate(
            [ap[0:t0, (f - 1) * chan:],                 # a[f*k - 1]
             ap[1:t0 + 1, :],                           # a[f*k .. f*k + f - 1]
             ap[2:t0 + 2, :chan]],                      # a[f*k + f]
            axis=1)                                     # (T0, (f+2)*C)
        up = jnp.dot(lhs, uw_ref[...], preferred_element_type=jnp.float32)
        c = up + ub_ref[...] + skip_refs[i][0].astype(jnp.float32)      # (T0, g*C)

        # ---- Residual stage:  c += (sum_j Conv1d_dj(LeakyReLU(c)) + sum_j b_j) / 3
        #  (rw packs the three dilated 3-tap convs, center taps summed, 1/3 folded in).
        a = _leaky(c)
        halo = -(-MAX_DIL // g)                         # ceil(MAX_DIL / g) zero rows each side
        zrows = jnp.zeros((halo, g * chan), jnp.float32)
        ap = jnp.concatenate([zrows, a, zrows], axis=0)  # (T0 + 2*halo, g*C)
        # im2col: folded row k needs samples g*k-5 .. g*k+g+4, gathered as a few contiguous
        # slices grouped by row shift s = floor(t / g).
        pieces = []
        s_lo = (-MAX_DIL) // g
        s_hi = (g + MAX_DIL - 1) // g
        for s in range(s_lo, s_hi + 1):
            lo = max(-MAX_DIL, s * g)                   # sample offsets [lo, hi)
            hi = min(g + MAX_DIL, (s + 1) * g)
            pieces.append(ap[halo + s: halo + s + t0,
                             (lo - s * g) * chan: (hi - s * g) * chan])
        lhs = jnp.concatenate(pieces, axis=1)           # (T0, (g + 2*MAX_DIL) * C)
        ys = jnp.dot(lhs, rw_ref[...], preferred_element_type=jnp.float32)
        c = c + ys + rb_ref[...]

    out_ref[...] = c[None].astype(out_ref.dtype)


# --------------------------- weight pre-packing -----------------------------

def _pack_up_weight(w_pt, f, chan):
    """PyTorch ConvTranspose1d weight (Cin, Cout, 4) -> folded polyphase matrix ((f+2)C, 2fC)."""
    w = [w_pt[:, :, k] for k in range(UP_K)]            # (Cin, Cout) tap matrices
    g = 2 * f
    mat = jnp.zeros(((f + 2) * chan, g * chan), w_pt.dtype)
    for r in range(f):
        mat = mat.at[r * chan:(r + 1) * chan, 2 * r * chan:(2 * r + 1) * chan].set(w[3])
        mat = mat.at[(r + 1) * chan:(r + 2) * chan, 2 * r * chan:(2 * r + 1) * chan].set(w[1])
        mat = mat.at[(r + 1) * chan:(r + 2) * chan, (2 * r + 1) * chan:(2 * r + 2) * chan].set(w[2])
        mat = mat.at[(r + 2) * chan:(r + 3) * chan, (2 * r + 1) * chan:(2 * r + 2) * chan].set(w[0])
    return mat


def _pack_res_weights(w_pt, b_pt, g, chan):
    """Stacked PyTorch Conv1d weights (J, Cout, Cin, 3) + biases (J, Cout) -> offset-summed
    folded matrix ((g+2*MAX_DIL)C, gC) and bias row (1, gC), both pre-scaled by 1/3."""
    offs = {}
    for j, d in enumerate(DILATIONS):
        for k, o in enumerate((-d, 0, d)):
            m = w_pt[j, :, :, k].T                      # (Cin, Cout)
            offs[o] = (offs[o] + m) if o in offs else m
    mat = jnp.zeros(((g + 2 * MAX_DIL) * chan, g * chan), w_pt.dtype)
    for q in range(g):
        for o, m in offs.items():
            i = q + MAX_DIL + o
            mat = mat.at[i * chan:(i + 1) * chan, q * chan:(q + 1) * chan].set(m)
    bias = jnp.tile(jnp.sum(b_pt, axis=0), g)[None, :]
    return mat / NUM_PROC_BLOCKS, bias / NUM_PROC_BLOCKS


# ------------------------------ JAX wrapper ---------------------------------

def filter_network_forward(inputs_btc, params):
    """inputs_btc: tuple of 5 arrays in (B, T_i, C); matches torch forward indexing."""
    c0 = inputs_btc[0]
    b, t0, chan = c0.shape
    skips = (inputs_btc[-1], inputs_btc[-2], inputs_btc[-3], inputs_btc[-4])
    fold_out = 2 ** NUM_STAGES

    operands = [c0]
    in_specs = [pl.BlockSpec((1, t0, chan), lambda gi: (gi, 0, 0))]
    for i in range(NUM_STAGES):
        g = 2 << i
        operands.append(skips[i].reshape(b, t0, g * chan))   # time-fold by g (row-major, free)
        in_specs.append(pl.BlockSpec((1, t0, g * chan), lambda gi: (gi, 0, 0)))
    for i in range(NUM_STAGES):
        f, g = 1 << i, 2 << i
        uw = _pack_up_weight(params["up_w"][i], f, chan)
        ub = jnp.tile(params["up_b"][i], g)[None, :]
        rw, rb = _pack_res_weights(params["proc_w"][i], params["proc_b"][i], g, chan)
        for arr in (uw, ub, rw, rb):
            operands.append(arr)
            in_specs.append(pl.BlockSpec(arr.shape, lambda gi: (0, 0)))

    out_folded = pl.pallas_call(
        functools.partial(_filter_net_kernel, chan=chan),
        out_shape=jax.ShapeDtypeStruct((b, t0, fold_out * chan), c0.dtype),
        grid=(b,),
        in_specs=in_specs,
        out_specs=pl.BlockSpec((1, t0, fold_out * chan), lambda gi: (gi, 0, 0)),
        compiler_params=pltpu.CompilerParams(dimension_semantics=("parallel",)),
    )(*operands)
    return out_folded.reshape(b, fold_out * t0, chan)        # unfold time (row-major, free)


# --------------------------- pure-JAX reference ----------------------------

def _ref_conv_transpose1d(x, w, bias):
    k = w.shape[-1]
    w_oik = jnp.flip(w, -1).transpose(1, 0, 2)
    y = jax.lax.conv_general_dilated(
        x, w_oik, window_strides=(1,),
        padding=[(k - 1 - UP_P, k - 1 - UP_P)],
        lhs_dilation=(UP_S,), rhs_dilation=(1,),
        dimension_numbers=("NCH", "OIH", "NCH"))
    return y + bias[None, :, None]


def _ref_conv1d(x, w, bias, d):
    y = jax.lax.conv_general_dilated(
        x, w, window_strides=(1,), padding=[(d, d)],
        rhs_dilation=(d,), dimension_numbers=("NCH", "OIH", "NCH"))
    return y + bias[None, :, None]


def ref_forward(inputs_nct, params):
    c = inputs_nct[0]
    skips = (inputs_nct[-1], inputs_nct[-2], inputs_nct[-3], inputs_nct[-4])
    for i in range(4):
        c = _ref_conv_transpose1d(_leaky(c), params["up_w"][i], params["up_b"][i]) + skips[i]
        cs = jnp.zeros_like(c)
        for jj, d in enumerate(DILATIONS):
            cs = cs + c + _ref_conv1d(_leaky(c), params["proc_w"][i][jj],
                                      params["proc_b"][i][jj], d)
        c = cs / NUM_PROC_BLOCKS
    return c


# ---------------------------------- main -----------------------------------

if __name__ == "__main__":
    B, C, T0 = 2, 8, 8
    key = jax.random.PRNGKey(0)
    k_in, k_w = jax.random.split(key)

    # Inputs in PyTorch NCW layout: (input0, input1, input2, input3, input4).
    # input0 feeds the first upsample; input4..input1 are the skip additions (shortest..longest).
    lens = [T0, T0 * 16, T0 * 8, T0 * 4, T0 * 2]
    in_keys = jax.random.split(k_in, len(lens))
    inputs_nct = tuple(
        jax.random.normal(in_keys[i], (B, C, lens[i]), jnp.float32)
        for i in range(len(lens)))

    wk = jax.random.split(k_w, 4 * 4)
    up_w, up_b, proc_w, proc_b = [], [], [], []
    for i in range(4):
        up_w.append(0.2 * jax.random.normal(wk[4 * i + 0], (C, C, UP_K), jnp.float32))
        up_b.append(0.05 * jax.random.normal(wk[4 * i + 1], (C,), jnp.float32))
        proc_w.append(0.2 * jax.random.normal(
            wk[4 * i + 2], (NUM_PROC_BLOCKS, C, C, RES_K), jnp.float32))
        proc_b.append(0.05 * jax.random.normal(
            wk[4 * i + 3], (NUM_PROC_BLOCKS, C), jnp.float32))
    params = {"up_w": up_w, "up_b": up_b, "proc_w": proc_w, "proc_b": proc_b}

    # Kernel path uses (B, T, C).
    inputs_btc = tuple(x.transpose(0, 2, 1) for x in inputs_nct)
    out_btc = jax.block_until_ready(filter_network_forward(inputs_btc, params))
    out_nct = out_btc.transpose(0, 2, 1)

    ref = jax.block_until_ready(ref_forward(inputs_nct, params))
    assert out_nct.shape == ref.shape == (B, C, T0 * 16)
    err = float(jnp.max(jnp.abs(out_nct - ref)))
    if err > 1e-3:
        raise AssertionError(f"mismatch vs reference: max abs err {err}")
    print("KERNEL_OK")
</pallas_src>

<mosaic_0001>
module attributes {stable_mosaic.version = 11 : i64} {
  func.func @_filter_net_kernel(%arg0: i32, %arg1: memref<1x8x8xf32, #tpu.memory_space<vmem>>, %arg2: memref<1x8x16xf32, #tpu.memory_space<vmem>>, %arg3: memref<1x8x32xf32, #tpu.memory_space<vmem>>, %arg4: memref<1x8x64xf32, #tpu.memory_space<vmem>>, %arg5: memref<1x8x128xf32, #tpu.memory_space<vmem>>, %arg6: memref<24x16xf32, #tpu.memory_space<vmem>>, %arg7: memref<1x16xf32, #tpu.memory_space<vmem>>, %arg8: memref<96x16xf32, #tpu.memory_space<vmem>>, %arg9: memref<1x16xf32, #tpu.memory_space<vmem>>, %arg10: memref<32x32xf32, #tpu.memory_space<vmem>>, %arg11: memref<1x32xf32, #tpu.memory_space<vmem>>, %arg12: memref<112x32xf32, #tpu.memory_space<vmem>>, %arg13: memref<1x32xf32, #tpu.memory_space<vmem>>, %arg14: memref<48x64xf32, #tpu.memory_space<vmem>>, %arg15: memref<1x64xf32, #tpu.memory_space<vmem>>, %arg16: memref<144x64xf32, #tpu.memory_space<vmem>>, %arg17: memref<1x64xf32, #tpu.memory_space<vmem>>, %arg18: memref<80x128xf32, #tpu.memory_space<vmem>>, %arg19: memref<1x128xf32, #tpu.memory_space<vmem>>, %arg20: memref<208x128xf32, #tpu.memory_space<vmem>>, %arg21: memref<1x128xf32, #tpu.memory_space<vmem>>, %arg22: memref<1x8x128xf32, #tpu.memory_space<vmem>>) attributes {dimension_semantics = [#tpu.dimension_semantics<parallel>], iteration_bounds = array<i64: 2>, scalar_prefetch = 0 : i64, scratch_operands = 0 : i64, tpu.core_type = #tpu.core_type<tc>, window_params = [{transform_indices = @transform_0, window_bounds = array<i64: 1, 8, 8>}, {transform_indices = @transform_1, window_bounds = array<i64: 1, 8, 16>}, {transform_indices = @transform_2, window_bounds = array<i64: 1, 8, 32>}, {transform_indices = @transform_3, window_bounds = array<i64: 1, 8, 64>}, {transform_indices = @transform_4, window_bounds = array<i64: 1, 8, 128>}, {pipeline_mode = #tpu.pipeline_mode<synchronous>, transform_indices = @transform_5, window_bounds = array<i64: 24, 16>}, {pipeline_mode = #tpu.pipeline_mode<synchronous>, transform_indices = @transform_6, window_bounds = array<i64: 1, 16>}, {pipeline_mode = #tpu.pipeline_mode<synchronous>, transform_indices = @transform_7, window_bounds = array<i64: 96, 16>}, {pipeline_mode = #tpu.pipeline_mode<synchronous>, transform_indices = @transform_8, window_bounds = array<i64: 1, 16>}, {pipeline_mode = #tpu.pipeline_mode<synchronous>, transform_indices = @transform_9, window_bounds = array<i64: 32, 32>}, {pipeline_mode = #tpu.pipeline_mode<synchronous>, transform_indices = @transform_10, window_bounds = array<i64: 1, 32>}, {pipeline_mode = #tpu.pipeline_mode<synchronous>, transform_indices = @transform_11, window_bounds = array<i64: 112, 32>}, {pipeline_mode = #tpu.pipeline_mode<synchronous>, transform_indices = @transform_12, window_bounds = array<i64: 1, 32>}, {pipeline_mode = #tpu.pipeline_mode<synchronous>, transform_indices = @transform_13, window_bounds = array<i64: 48, 64>}, {pipeline_mode = #tpu.pipeline_mode<synchronous>, transform_indices = @transform_14, window_bounds = array<i64: 1, 64>}, {pipeline_mode = #tpu.pipeline_mode<synchronous>, transform_indices = @transform_15, window_bounds = array<i64: 144, 64>}, {pipeline_mode = #tpu.pipeline_mode<synchronous>, transform_indices = @transform_16, window_bounds = array<i64: 1, 64>}, {pipeline_mode = #tpu.pipeline_mode<synchronous>, transform_indices = @transform_17, window_bounds = array<i64: 80, 128>}, {pipeline_mode = #tpu.pipeline_mode<synchronous>, transform_indices = @transform_18, window_bounds = array<i64: 1, 128>}, {pipeline_mode = #tpu.pipeline_mode<synchronous>, transform_indices = @transform_19, window_bounds = array<i64: 208, 128>}, {pipeline_mode = #tpu.pipeline_mode<synchronous>, transform_indices = @transform_20, window_bounds = array<i64: 1, 128>}, {transform_indices = @transform_21, window_bounds = array<i64: 1, 8, 128>}]} {
    %c0 = arith.constant 0 : index
    %c0_0 = arith.constant 0 : index
    %c0_1 = arith.constant 0 : index
    %0 = vector.load %arg1[%c0, %c0_0, %c0_1] : memref<1x8x8xf32, #tpu.memory_space<vmem>>, vector<1x8x8xf32>
    %1 = vector.shape_cast %0 : vector<1x8x8xf32> to vector<8x8xf32>
    %cst = arith.constant 0.000000e+00 : f32
    %2 = vector.broadcast %cst : f32 to vector<8x8xf32>
    %3 = arith.cmpf oge, %1, %2 : vector<8x8xf32>
    %cst_2 = arith.constant 1.000000e-01 : f32
    %4 = vector.broadcast %cst_2 : f32 to vector<8x8xf32>
    %5 = arith.mulf %4, %1 : vector<8x8xf32>
    %6 = arith.select %3, %1, %5 : vector<8x8xi1>, vector<8x8xf32>
    %cst_3 = arith.constant 0.000000e+00 : f32
    %7 = vector.broadcast %cst_3 : f32 to vector<1x8xf32>
    %8 = tpu.concatenate %7, %6, %7 in 0 : vector<1x8xf32>, vector<8x8xf32>, vector<1x8xf32> -> vector<10x8xf32>
    %9 = vector.extract_strided_slice %8 {offsets = [0, 0], sizes = [8, 8], strides = [1, 1]} : vector<10x8xf32> to vector<8x8xf32>
    %10 = vector.extract_strided_slice %8 {offsets = [1, 0], sizes = [8, 8], strides = [1, 1]} : vector<10x8xf32> to vector<8x8xf32>
    %11 = vector.extract_strided_slice %8 {offsets = [2, 0], sizes = [8, 8], strides = [1, 1]} : vector<10x8xf32> to vector<8x8xf32>
    %12 = tpu.concatenate %9, %10, %11 in 1 : vector<8x8xf32>, vector<8x8xf32>, vector<8x8xf32> -> vector<8x24xf32>
    %c0_4 = arith.constant 0 : index
    %c0_5 = arith.constant 0 : index
    %13 = vector.load %arg6[%c0_4, %c0_5] : memref<24x16xf32, #tpu.memory_space<vmem>>, vector<24x16xf32>
    %cst_6 = arith.constant dense<0.000000e+00> : vector<8x16xf32>
    %14 = tpu.matmul %12, %13, %cst_6 {dimension_numbers = #tpu.dot_dimension_numbers<[1], [0], [0], [1], [0, 0, 1, 1], [], []>} : vector<8x24xf32>, vector<24x16xf32>, vector<8x16xf32> -> vector<8x16xf32>
    %c0_7 = arith.constant 0 : index
    %c0_8 = arith.constant 0 : index
    %15 = vector.load %arg7[%c0_7, %c0_8] : memref<1x16xf32, #tpu.memory_space<vmem>>, vector<1x16xf32>
    %16 = vector.broadcast %15 : vector<1x16xf32> to vector<8x16xf32>
    %17 = arith.addf %14, %16 : vector<8x16xf32>
    %c0_9 = arith.constant 0 : index
    %c0_10 = arith.constant 0 : index
    %c0_11 = arith.constant 0 : index
    %18 = vector.load %arg2[%c0_9, %c0_10, %c0_11] : memref<1x8x16xf32, #tpu.memory_space<vmem>>, vector<1x8x16xf32>
    %19 = vector.shape_cast %18 : vector<1x8x16xf32> to vector<8x16xf32>
    %20 = arith.addf %17, %19 : vector<8x16xf32>
    %cst_12 = arith.constant 0.000000e+00 : f32
    %21 = vector.broadcast %cst_12 : f32 to vector<8x16xf32>
    %22 = arith.cmpf oge, %20, %21 : vector<8x16xf32>
    %cst_13 = arith.constant 1.000000e-01 : f32
    %23 = vector.broadcast %cst_13 : f32 to vector<8x16xf32>
    %24 = arith.mulf %23, %20 : vector<8x16xf32>
    %25 = arith.select %22, %20, %24 : vector<8x16xi1>, vector<8x16xf32>
    %cst_14 = arith.constant 0.000000e+00 : f32
    %26 = vector.broadcast %cst_14 : f32 to vector<3x16xf32>
    %27 = tpu.concatenate %26, %25, %26 in 0 : vector<3x16xf32>, vector<8x16xf32>, vector<3x16xf32> -> vector<14x16xf32>
    %28 = vector.extract_strided_slice %27 {offsets = [0, 8], sizes = [8, 8], strides = [1, 1]} : vector<14x16xf32> to vector<8x8xf32>
    %29 = vector.extract_strided_slice %27 {offsets = [1, 0], sizes = [8, 16], strides = [1, 1]} : vector<14x16xf32> to vector<8x16xf32>
    %30 = vector.extract_strided_slice %27 {offsets = [2, 0], sizes = [8, 16], strides = [1, 1]} : vector<14x16xf32> to vector<8x16xf32>
    %31 = vector.extract_strided_slice %27 {offsets = [3, 0], sizes = [8, 16], strides = [1, 1]} : vector<14x16xf32> to vector<8x16xf32>
    %32 = vector.extract_strided_slice %27 {offsets = [4, 0], sizes = [8, 16], strides = [1, 1]} : vector<14x16xf32> to vector<8x16xf32>
    %33 = vector.extract_strided_slice %27 {offsets = [5, 0], sizes = [8, 16], strides = [1, 1]} : vector<14x16xf32> to vector<8x16xf32>
    %34 = vector.extract_strided_slice %27 {offsets = [6, 0], sizes = [8, 8], strides = [1, 1]} : vector<14x16xf32> to vector<8x8xf32>
    %35 = tpu.concatenate %28, %29, %30, %31, %32, %33, %34 in 1 : vector<8x8xf32>, vector<8x16xf32>, vector<8x16xf32>, vector<8x16xf32>, vector<8x16xf32>, vector<8x16xf32>, vector<8x8xf32> -> vector<8x96xf32>
    %c0_15 = arith.constant 0 : index
    %c0_16 = arith.constant 0 : index
    %36 = vector.load %arg8[%c0_15, %c0_16] : memref<96x16xf32, #tpu.memory_space<vmem>>, vector<96x16xf32>
    %cst_17 = arith.constant dense<0.000000e+00> : vector<8x16xf32>
    %37 = tpu.matmul %35, %36, %cst_17 {dimension_numbers = #tpu.dot_dimension_numbers<[1], [0], [0], [1], [0, 0, 1, 1], [], []>} : vector<8x96xf32>, vector<96x16xf32>, vector<8x16xf32> -> vector<8x16xf32>
    %38 = arith.addf %20, %37 : vector<8x16xf32>
    %c0_18 = arith.constant 0 : index
    %c0_19 = arith.constant 0 : index
    %39 = vector.load %arg9[%c0_18, %c0_19] : memref<1x16xf32, #tpu.memory_space<vmem>>, vector<1x16xf32>
    %40 = vector.broadcast %39 : vector<1x16xf32> to vector<8x16xf32>
    %41 = arith.addf %38, %40 : vector<8x16xf32>
    %cst_20 = arith.constant 0.000000e+00 : f32
    %42 = vector.broadcast %cst_20 : f32 to vector<8x16xf32>
    %43 = arith.cmpf oge, %41, %42 : vector<8x16xf32>
    %cst_21 = arith.constant 1.000000e-01 : f32
    %44 = vector.broadcast %cst_21 : f32 to vector<8x16xf32>
    %45 = arith.mulf %44, %41 : vector<8x16xf32>
    %46 = arith.select %43, %41, %45 : vector<8x16xi1>, vector<8x16xf32>
    %cst_22 = arith.constant 0.000000e+00 : f32
    %47 = vector.broadcast %cst_22 : f32 to vector<1x16xf32>
    %48 = tpu.concatenate %47, %46, %47 in 0 : vector<1x16xf32>, vector<8x16xf32>, vector<1x16xf32> -> vector<10x16xf32>
    %49 = vector.extract_strided_slice %48 {offsets = [0, 8], sizes = [8, 8], strides = [1, 1]} : vector<10x16xf32> to vector<8x8xf32>
    %50 = vector.extract_strided_slice %48 {offsets = [1, 0], sizes = [8, 16], strides = [1, 1]} : vector<10x16xf32> to vector<8x16xf32>
    %51 = vector.extract_strided_slice %48 {offsets = [2, 0], sizes = [8, 8], strides = [1, 1]} : vector<10x16xf32> to vector<8x8xf32>
    %52 = tpu.concatenate %49, %50, %51 in 1 : vector<8x8xf32>, vector<8x16xf32>, vector<8x8xf32> -> vector<8x32xf32>
    %c0_23 = arith.constant 0 : index
    %c0_24 = arith.constant 0 : index
    %53 = vector.load %arg10[%c0_23, %c0_24] : memref<32x32xf32, #tpu.memory_space<vmem>>, vector<32x32xf32>
    %cst_25 = arith.constant dense<0.000000e+00> : vector<8x32xf32>
    %54 = tpu.matmul %52, %53, %cst_25 {dimension_numbers = #tpu.dot_dimension_numbers<[1], [0], [0], [1], [0, 0, 1, 1], [], []>} : vector<8x32xf32>, vector<32x32xf32>, vector<8x32xf32> -> vector<8x32xf32>
    %c0_26 = arith.constant 0 : index
    %c0_27 = arith.constant 0 : index
    %55 = vector.load %arg11[%c0_26, %c0_27] : memref<1x32xf32, #tpu.memory_space<vmem>>, vector<1x32xf32>
    %56 = vector.broadcast %55 : vector<1x32xf32> to vector<8x32xf32>
    %57 = arith.addf %54, %56 : vector<8x32xf32>
    %c0_28 = arith.constant 0 : index
    %c0_29 = arith.constant 0 : index
    %c0_30 = arith.constant 0 : index
    %58 = vector.load %arg3[%c0_28, %c0_29, %c0_30] : memref<1x8x32xf32, #tpu.memory_space<vmem>>, vector<1x8x32xf32>
    %59 = vector.shape_cast %58 : vector<1x8x32xf32> to vector<8x32xf32>
    %60 = arith.addf %57, %59 : vector<8x32xf32>
    %cst_31 = arith.constant 0.000000e+00 : f32
    %61 = vector.broadcast %cst_31 : f32 to vector<8x32xf32>
    %62 = arith.cmpf oge, %60, %61 : vector<8x32xf32>
    %cst_32 = arith.constant 1.000000e-01 : f32
    %63 = vector.broadcast %cst_32 : f32 to vector<8x32xf32>
    %64 = arith.mulf %63, %60 : vector<8x32xf32>
    %65 = arith.select %62, %60, %64 : vector<8x32xi1>, vector<8x32xf32>
    %cst_33 = arith.constant 0.000000e+00 : f32
    %66 = vector.broadcast %cst_33 : f32 to vector<2x32xf32>
    %67 = tpu.concatenate %66, %65, %66 in 0 : vector<2x32xf32>, vector<8x32xf32>, vector<2x32xf32> -> vector<12x32xf32>
    %68 = vector.extract_strided_slice %67 {offsets = [0, 24], sizes = [8, 8], strides = [1, 1]} : vector<12x32xf32> to vector<8x8xf32>
    %69 = vector.extract_strided_slice %67 {offsets = [1, 0], sizes = [8, 32], strides = [1, 1]} : vector<12x32xf32> to vector<8x32xf32>
    %70 = vector.extract_strided_slice %67 {offsets = [2, 0], sizes = [8, 32], strides = [1, 1]} : vector<12x32xf32> to vector<8x32xf32>
    %71 = vector.extract_strided_slice %67 {offsets = [3, 0], sizes = [8, 32], strides = [1, 1]} : vector<12x32xf32> to vector<8x32xf32>
    %72 = vector.extract_strided_slice %67 {offsets = [4, 0], sizes = [8, 8], strides = [1, 1]} : vector<12x32xf32> to vector<8x8xf32>
    %73 = tpu.concatenate %68, %69, %70, %71, %72 in 1 : vector<8x8xf32>, vector<8x32xf32>, vector<8x32xf32>, vector<8x32xf32>, vector<8x8xf32> -> vector<8x112xf32>
    %c0_34 = arith.constant 0 : index
    %c0_35 = arith.constant 0 : index
    %74 = vector.load %arg12[%c0_34, %c0_35] : memref<112x32xf32, #tpu.memory_space<vmem>>, vector<112x32xf32>
    %cst_36 = arith.constant dense<0.000000e+00> : vector<8x32xf32>
    %75 = tpu.matmul %73, %74, %cst_36 {dimension_numbers = #tpu.dot_dimension_numbers<[1], [0], [0], [1], [0, 0, 1, 1], [], []>} : vector<8x112xf32>, vector<112x32xf32>, vector<8x32xf32> -> vector<8x32xf32>
    %76 = arith.addf %60, %75 : vector<8x32xf32>
    %c0_37 = arith.constant 0 : index
    %c0_38 = arith.constant 0 : index
    %77 = vector.load %arg13[%c0_37, %c0_38] : memref<1x32xf32, #tpu.memory_space<vmem>>, vector<1x32xf32>
    %78 = vector.broadcast %77 : vector<1x32xf32> to vector<8x32xf32>
    %79 = arith.addf %76, %78 : vector<8x32xf32>
    %cst_39 = arith.constant 0.000000e+00 : f32
    %80 = vector.broadcast %cst_39 : f32 to vector<8x32xf32>
    %81 = arith.cmpf oge, %79, %80 : vector<8x32xf32>
    %cst_40 = arith.constant 1.000000e-01 : f32
    %82 = vector.broadcast %cst_40 : f32 to vector<8x32xf32>
    %83 = arith.mulf %82, %79 : vector<8x32xf32>
    %84 = arith.select %81, %79, %83 : vector<8x32xi1>, vector<8x32xf32>
    %cst_41 = arith.constant 0.000000e+00 : f32
    %85 = vector.broadcast %cst_41 : f32 to vector<1x32xf32>
    %86 = tpu.concatenate %85, %84, %85 in 0 : vector<1x32xf32>, vector<8x32xf32>, vector<1x32xf32> -> vector<10x32xf32>
    %87 = vector.extract_strided_slice %86 {offsets = [0, 24], sizes = [8, 8], strides = [1, 1]} : vector<10x32xf32> to vector<8x8xf32>
    %88 = vector.extract_strided_slice %86 {offsets = [1, 0], sizes = [8, 32], strides = [1, 1]} : vector<10x32xf32> to vector<8x32xf32>
    %89 = vector.extract_strided_slice %86 {offsets = [2, 0], sizes = [8, 8], strides = [1, 1]} : vector<10x32xf32> to vector<8x8xf32>
    %90 = tpu.concatenate %87, %88, %89 in 1 : vector<8x8xf32>, vector<8x32xf32>, vector<8x8xf32> -> vector<8x48xf32>
    %c0_42 = arith.constant 0 : index
    %c0_43 = arith.constant 0 : index
    %91 = vector.load %arg14[%c0_42, %c0_43] : memref<48x64xf32, #tpu.memory_space<vmem>>, vector<48x64xf32>
    %cst_44 = arith.constant dense<0.000000e+00> : vector<8x64xf32>
    %92 = tpu.matmul %90, %91, %cst_44 {dimension_numbers = #tpu.dot_dimension_numbers<[1], [0], [0], [1], [0, 0, 1, 1], [], []>} : vector<8x48xf32>, vector<48x64xf32>, vector<8x64xf32> -> vector<8x64xf32>
    %c0_45 = arith.constant 0 : index
    %c0_46 = arith.constant 0 : index
    %93 = vector.load %arg15[%c0_45, %c0_46] : memref<1x64xf32, #tpu.memory_space<vmem>>, vector<1x64xf32>
    %94 = vector.broadcast %93 : vector<1x64xf32> to vector<8x64xf32>
    %95 = arith.addf %92, %94 : vector<8x64xf32>
    %c0_47 = arith.constant 0 : index
    %c0_48 = arith.constant 0 : index
    %c0_49 = arith.constant 0 : index
    %96 = vector.load %arg4[%c0_47, %c0_48, %c0_49] : memref<1x8x64xf32, #tpu.memory_space<vmem>>, vector<1x8x64xf32>
    %97 = vector.shape_cast %96 : vector<1x8x64xf32> to vector<8x64xf32>
    %98 = arith.addf %95, %97 : vector<8x64xf32>
    %cst_50 = arith.constant 0.000000e+00 : f32
    %99 = vector.broadcast %cst_50 : f32 to vector<8x64xf32>
    %100 = arith.cmpf oge, %98, %99 : vector<8x64xf32>
    %cst_51 = arith.constant 1.000000e-01 : f32
    %101 = vector.broadcast %cst_51 : f32 to vector<8x64xf32>
    %102 = arith.mulf %101, %98 : vector<8x64xf32>
    %103 = arith.select %100, %98, %102 : vector<8x64xi1>, vector<8x64xf32>
    %cst_52 = arith.constant 0.000000e+00 : f32
    %104 = vector.broadcast %cst_52 : f32 to vector<1x64xf32>
    %105 = tpu.concatenate %104, %103, %104 in 0 : vector<1x64xf32>, vector<8x64xf32>, vector<1x64xf32> -> vector<10x64xf32>
    %106 = vector.extract_strided_slice %105 {offsets = [0, 24], sizes = [8, 40], strides = [1, 1]} : vector<10x64xf32> to vector<8x40xf32>
    %107 = vector.extract_strided_slice %105 {offsets = [1, 0], sizes = [8, 64], strides = [1, 1]} : vector<10x64xf32> to vector<8x64xf32>
    %108 = vector.extract_strided_slice %105 {offsets = [2, 0], sizes = [8, 40], strides = [1, 1]} : vector<10x64xf32> to vector<8x40xf32>
    %109 = tpu.concatenate %106, %107, %108 in 1 : vector<8x40xf32>, vector<8x64xf32>, vector<8x40xf32> -> vector<8x144xf32>
    %c0_53 = arith.constant 0 : index
    %c0_54 = arith.constant 0 : index
    %110 = vector.load %arg16[%c0_53, %c0_54] : memref<144x64xf32, #tpu.memory_space<vmem>>, vector<144x64xf32>
    %cst_55 = arith.constant dense<0.000000e+00> : vector<8x64xf32>
    %111 = tpu.matmul %109, %110, %cst_55 {dimension_numbers = #tpu.dot_dimension_numbers<[1], [0], [0], [1], [0, 0, 1, 1], [], []>} : vector<8x144xf32>, vector<144x64xf32>, vector<8x64xf32> -> vector<8x64xf32>
    %112 = arith.addf %98, %111 : vector<8x64xf32>
    %c0_56 = arith.constant 0 : index
    %c0_57 = arith.constant 0 : index
    %113 = vector.load %arg17[%c0_56, %c0_57] : memref<1x64xf32, #tpu.memory_space<vmem>>, vector<1x64xf32>
    %114 = vector.broadcast %113 : vector<1x64xf32> to vector<8x64xf32>
    %115 = arith.addf %112, %114 : vector<8x64xf32>
    %cst_58 = arith.constant 0.000000e+00 : f32
    %116 = vector.broadcast %cst_58 : f32 to vector<8x64xf32>
    %117 = arith.cmpf oge, %115, %116 : vector<8x64xf32>
    %cst_59 = arith.constant 1.000000e-01 : f32
    %118 = vector.broadcast %cst_59 : f32 to vector<8x64xf32>
    %119 = arith.mulf %118, %115 : vector<8x64xf32>
    %120 = arith.select %117, %115, %119 : vector<8x64xi1>, vector<8x64xf32>
    %cst_60 = arith.constant 0.000000e+00 : f32
    %121 = vector.broadcast %cst_60 : f32 to vector<1x64xf32>
    %122 = tpu.concatenate %121, %120, %121 in 0 : vector<1x64xf32>, vector<8x64xf32>, vector<1x64xf32> -> vector<10x64xf32>
    %123 = vector.extract_strided_slice %122 {offsets = [0, 56], sizes = [8, 8], strides = [1, 1]} : vector<10x64xf32> to vector<8x8xf32>
    %124 = vector.extract_strided_slice %122 {offsets = [1, 0], sizes = [8, 64], strides = [1, 1]} : vector<10x64xf32> to vector<8x64xf32>
    %125 = vector.extract_strided_slice %122 {offsets = [2, 0], sizes = [8, 8], strides = [1, 1]} : vector<10x64xf32> to vector<8x8xf32>
    %126 = tpu.concatenate %123, %124, %125 in 1 : vector<8x8xf32>, vector<8x64xf32>, vector<8x8xf32> -> vector<8x80xf32>
    %c0_61 = arith.constant 0 : index
    %c0_62 = arith.constant 0 : index
    %127 = vector.load %arg18[%c0_61, %c0_62] : memref<80x128xf32, #tpu.memory_space<vmem>>, vector<80x128xf32>
    %cst_63 = arith.constant dense<0.000000e+00> : vector<8x128xf32>
    %128 = tpu.matmul %126, %127, %cst_63 {dimension_numbers = #tpu.dot_dimension_numbers<[1], [0], [0], [1], [0, 0, 1, 1], [], []>} : vector<8x80xf32>, vector<80x128xf32>, vector<8x128xf32> -> vector<8x128xf32>
    %c0_64 = arith.constant 0 : index
    %c0_65 = arith.constant 0 : index
    %129 = vector.load %arg19[%c0_64, %c0_65] : memref<1x128xf32, #tpu.memory_space<vmem>>, vector<1x128xf32>
    %130 = vector.broadcast %129 : vector<1x128xf32> to vector<8x128xf32>
    %131 = arith.addf %128, %130 : vector<8x128xf32>
    %c0_66 = arith.constant 0 : index
    %c0_67 = arith.constant 0 : index
    %c0_68 = arith.constant 0 : index
    %132 = vector.load %arg5[%c0_66, %c0_67, %c0_68] : memref<1x8x128xf32, #tpu.memory_space<vmem>>, vector<1x8x128xf32>
    %133 = vector.shape_cast %132 : vector<1x8x128xf32> to vector<8x128xf32>
    %134 = arith.addf %131, %133 : vector<8x128xf32>
    %cst_69 = arith.constant 0.000000e+00 : f32
    %135 = vector.broadcast %cst_69 : f32 to vector<8x128xf32>
    %136 = arith.cmpf oge, %134, %135 : vector<8x128xf32>
    %cst_70 = arith.constant 1.000000e-01 : f32
    %137 = vector.broadcast %cst_70 : f32 to vector<8x128xf32>
    %138 = arith.mulf %137, %134 : vector<8x128xf32>
    %139 = arith.select %136, %134, %138 : vector<8x128xi1>, vector<8x128xf32>
    %cst_71 = arith.constant 0.000000e+00 : f32
    %140 = vector.broadcast %cst_71 : f32 to vector<1x128xf32>
    %141 = tpu.concatenate %140, %139, %140 in 0 : vector<1x128xf32>, vector<8x128xf32>, vector<1x128xf32> -> vector<10x128xf32>
    %142 = vector.extract_strided_slice %141 {offsets = [0, 88], sizes = [8, 40], strides = [1, 1]} : vector<10x128xf32> to vector<8x40xf32>
    %143 = vector.extract_strided_slice %141 {offsets = [1, 0], sizes = [8, 128], strides = [1, 1]} : vector<10x128xf32> to vector<8x128xf32>
    %144 = vector.extract_strided_slice %141 {offsets = [2, 0], sizes = [8, 40], strides = [1, 1]} : vector<10x128xf32> to vector<8x40xf32>
    %145 = tpu.concatenate %142, %143, %144 in 1 : vector<8x40xf32>, vector<8x128xf32>, vector<8x40xf32> -> vector<8x208xf32>
    %c0_72 = arith.constant 0 : index
    %c0_73 = arith.constant 0 : index
    %146 = vector.load %arg20[%c0_72, %c0_73] : memref<208x128xf32, #tpu.memory_space<vmem>>, vector<208x128xf32>
    %cst_74 = arith.constant dense<0.000000e+00> : vector<8x128xf32>
    %147 = tpu.matmul %145, %146, %cst_74 {dimension_numbers = #tpu.dot_dimension_numbers<[1], [0], [0], [1], [0, 0, 1, 1], [], []>} : vector<8x208xf32>, vector<208x128xf32>, vector<8x128xf32> -> vector<8x128xf32>
    %148 = arith.addf %134, %147 : vector<8x128xf32>
    %c0_75 = arith.constant 0 : index
    %c0_76 = arith.constant 0 : index
    %149 = vector.load %arg21[%c0_75, %c0_76] : memref<1x128xf32, #tpu.memory_space<vmem>>, vector<1x128xf32>
    %150 = vector.broadcast %149 : vector<1x128xf32> to vector<8x128xf32>
    %151 = arith.addf %148, %150 : vector<8x128xf32>
    %152 = vector.shape_cast %151 : vector<8x128xf32> to vector<1x8x128xf32>
    %c0_77 = arith.constant 0 : index
    %c0_78 = arith.constant 0 : index
    %c0_79 = arith.constant 0 : index
    %153 = vector.load %arg22[%c0_77, %c0_78, %c0_79] : memref<1x8x128xf32, #tpu.memory_space<vmem>>, vector<1x8x128xf32>
    tpu.vector_store %arg22[%c0_77, %c0_78, %c0_79], %152 {strides = array<i32>} : memref<1x8x128xf32, #tpu.memory_space<vmem>>, vector<1x8x128xf32>,
    return
  }
  func.func @transform_0(%arg0: i32) -> (i32, i32, i32) {
    %c0_i32 = arith.constant 0 : i32
    %c0_i32_0 = arith.constant 0 : i32
    %c0_i32_1 = arith.constant 0 : i32
    return %arg0, %c0_i32, %c0_i32_0 : i32, i32, i32
  }
  func.func @transform_1(%arg0: i32) -> (i32, i32, i32) {
    %c0_i32 = arith.constant 0 : i32
    %c0_i32_0 = arith.constant 0 : i32
    %c0_i32_1 = arith.constant 0 : i32
    return %arg0, %c0_i32, %c0_i32_0 : i32, i32, i32
  }
  func.func @transform_2(%arg0: i32) -> (i32, i32, i32) {
    %c0_i32 = arith.constant 0 : i32
    %c0_i32_0 = arith.constant 0 : i32
    %c0_i32_1 = arith.constant 0 : i32
    return %arg0, %c0_i32, %c0_i32_0 : i32, i32, i32
  }
  func.func @transform_3(%arg0: i32) -> (i32, i32, i32) {
    %c0_i32 = arith.constant 0 : i32
    %c0_i32_0 = arith.constant 0 : i32
    %c0_i32_1 = arith.constant 0 : i32
    return %arg0, %c0_i32, %c0_i32_0 : i32, i32, i32
  }
  func.func @transform_4(%arg0: i32) -> (i32, i32, i32) {
    %c0_i32 = arith.constant 0 : i32
    %c0_i32_0 = arith.constant 0 : i32
    %c0_i32_1 = arith.constant 0 : i32
    return %arg0, %c0_i32, %c0_i32_0 : i32, i32, i32
  }
  func.func @transform_5(%arg0: i32) -> (i32, i32) {
    %c0_i32 = arith.constant 0 : i32
    %c0_i32_0 = arith.constant 0 : i32
    %c0_i32_1 = arith.constant 0 : i32
    return %c0_i32, %c0_i32_0 : i32, i32
  }
  func.func @transform_6(%arg0: i32) -> (i32, i32) {
    %c0_i32 = arith.constant 0 : i32
    %c0_i32_0 = arith.constant 0 : i32
    %c0_i32_1 = arith.constant 0 : i32
    return %c0_i32, %c0_i32_0 : i32, i32
  }
  func.func @transform_7(%arg0: i32) -> (i32, i32) {
    %c0_i32 = arith.constant 0 : i32
    %c0_i32_0 = arith.constant 0 : i32
    %c0_i32_1 = arith.constant 0 : i32
    return %c0_i32, %c0_i32_0 : i32, i32
  }
  func.func @transform_8(%arg0: i32) -> (i32, i32) {
    %c0_i32 = arith.constant 0 : i32
    %c0_i32_0 = arith.constant 0 : i32
    %c0_i32_1 = arith.constant 0 : i32
    return %c0_i32, %c0_i32_0 : i32, i32
  }
  func.func @transform_9(%arg0: i32) -> (i32, i32) {
    %c0_i32 = arith.constant 0 : i32
    %c0_i32_0 = arith.constant 0 : i32
    %c0_i32_1 = arith.constant 0 : i32
    return %c0_i32, %c0_i32_0 : i32, i32
  }
  func.func @transform_10(%arg0: i32) -> (i32, i32) {
    %c0_i32 = arith.constant 0 : i32
    %c0_i32_0 = arith.constant 0 : i32
    %c0_i32_1 = arith.constant 0 : i32
    return %c0_i32, %c0_i32_0 : i32, i32
  }
  func.func @transform_11(%arg0: i32) -> (i32, i32) {
    %c0_i32 = arith.constant 0 : i32
    %c0_i32_0 = arith.constant 0 : i32
    %c0_i32_1 = arith.constant 0 : i32
    return %c0_i32, %c0_i32_0 : i32, i32
  }
  func.func @transform_12(%arg0: i32) -> (i32, i32) {
    %c0_i32 = arith.constant 0 : i32
    %c0_i32_0 = arith.constant 0 : i32
    %c0_i32_1 = arith.constant 0 : i32
    return %c0_i32, %c0_i32_0 : i32, i32
  }
  func.func @transform_13(%arg0: i32) -> (i32, i32) {
    %c0_i32 = arith.constant 0 : i32
    %c0_i32_0 = arith.constant 0 : i32
    %c0_i32_1 = arith.constant 0 : i32
    return %c0_i32, %c0_i32_0 : i32, i32
  }
  func.func @transform_14(%arg0: i32) -> (i32, i32) {
    %c0_i32 = arith.constant 0 : i32
    %c0_i32_0 = arith.constant 0 : i32
    %c0_i32_1 = arith.constant 0 : i32
    return %c0_i32, %c0_i32_0 : i32, i32
  }
  func.func @transform_15(%arg0: i32) -> (i32, i32) {
    %c0_i32 = arith.constant 0 : i32
    %c0_i32_0 = arith.constant 0 : i32
    %c0_i32_1 = arith.constant 0 : i32
    return %c0_i32, %c0_i32_0 : i32, i32
  }
  func.func @transform_16(%arg0: i32) -> (i32, i32) {
    %c0_i32 = arith.constant 0 : i32
    %c0_i32_0 = arith.constant 0 : i32
    %c0_i32_1 = arith.constant 0 : i32
    return %c0_i32, %c0_i32_0 : i32, i32
  }
  func.func @transform_17(%arg0: i32) -> (i32, i32) {
    %c0_i32 = arith.constant 0 : i32
    %c0_i32_0 = arith.constant 0 : i32
    %c0_i32_1 = arith.constant 0 : i32
    return %c0_i32, %c0_i32_0 : i32, i32
  }
  func.func @transform_18(%arg0: i32) -> (i32, i32) {
    %c0_i32 = arith.constant 0 : i32
    %c0_i32_0 = arith.constant 0 : i32
    %c0_i32_1 = arith.constant 0 : i32
    return %c0_i32, %c0_i32_0 : i32, i32
  }
  func.func @transform_19(%arg0: i32) -> (i32, i32) {
    %c0_i32 = arith.constant 0 : i32
    %c0_i32_0 = arith.constant 0 : i32
    %c0_i32_1 = arith.constant 0 : i32
    return %c0_i32, %c0_i32_0 : i32, i32
  }
  func.func @transform_20(%arg0: i32) -> (i32, i32) {
    %c0_i32 = arith.constant 0 : i32
    %c0_i32_0 = arith.constant 0 : i32
    %c0_i32_1 = arith.constant 0 : i32
    return %c0_i32, %c0_i32_0 : i32, i32
  }
  func.func @transform_21(%arg0: i32) -> (i32, i32, i32) {
    %c0_i32 = arith.constant 0 : i32
    %c0_i32_0 = arith.constant 0 : i32
    %c0_i32_1 = arith.constant 0 : i32
    return %arg0, %c0_i32, %c0_i32_0 : i32, i32, i32
  }
}

</mosaic_0001>

<llo_original>
// kernel: tpu_custom_call.1
$region0: #{tpu_custom_call.1}
  #allocation0 [shape = 'u32[]', space=smem, size = 0x4, offset = 0x4, fixed_abs, tag = 'smem constant byte address 0x4 - core index']
  #allocation1 [shape = 'u32[144,128]{1,0:T(1,128)}', space=vmem, size = 0x12000, scoped, tag = 'internal scratch']
  %s0 = inlined_call_operand.vmem [shape: f32[2,8,8], index: 0, kind: input, shape index: {}]
  %s1 = inlined_call_operand.hbm [shape: f32[2,8,16], index: 1, kind: input, shape index: {}]
  %s2 = inlined_call_operand.hbm [shape: f32[2,8,32], index: 2, kind: input, shape index: {}]
  %s3 = inlined_call_operand.hbm [shape: f32[2,8,64], index: 3, kind: input, shape index: {}]
  %s4 = inlined_call_operand.vmem [shape: f32[2,8,128], index: 4, kind: input, shape index: {}]
  %s5 = inlined_call_operand.vmem [shape: f32[24,16], index: 5, kind: input, shape index: {}]
  %s6 = inlined_call_operand.vmem [shape: f32[1,16], index: 6, kind: input, shape index: {}]
  %s7 = inlined_call_operand.vmem [shape: f32[96,16], index: 7, kind: input, shape index: {}]
  %s8 = inlined_call_operand.vmem [shape: f32[1,16], index: 8, kind: input, shape index: {}]
  %s9 = inlined_call_operand.vmem [shape: f32[32,32], index: 9, kind: input, shape index: {}]
  %s10 = inlined_call_operand.vmem [shape: f32[1,32], index: 10, kind: input, shape index: {}]
  %s11 = inlined_call_operand.vmem [shape: f32[112,32], index: 11, kind: input, shape index: {}]
  %s12 = inlined_call_operand.vmem [shape: f32[1,32], index: 12, kind: input, shape index: {}]
  %s13 = inlined_call_operand.vmem [shape: f32[48,64], index: 13, kind: input, shape index: {}]
  %s14 = inlined_call_operand.vmem [shape: f32[1,64], index: 14, kind: input, shape index: {}]
  %s15 = inlined_call_operand.vmem [shape: f32[144,64], index: 15, kind: input, shape index: {}]
  %s16 = inlined_call_operand.vmem [shape: f32[1,64], index: 16, kind: input, shape index: {}]
  %s17 = inlined_call_operand.vmem [shape: f32[80,128], index: 17, kind: input, shape index: {}]
  %s18 = inlined_call_operand.vmem [shape: f32[1,128], index: 18, kind: input, shape index: {}]
  %s19 = inlined_call_operand.vmem [shape: f32[208,128], index: 19, kind: input, shape index: {}]
  %s20 = inlined_call_operand.vmem [shape: f32[1,128], index: 20, kind: input, shape index: {}]
  %s21 = inlined_call_operand.hbm [shape: f32[2,8,128], index: 21, kind: output, shape index: {}]
  %s22 = sld [smem:[#allocation0]]
  $region129: #{tpu_custom_call.1} parent=0
    _
  %s24 = ssub.s32 1, %s22
  %s25 = scalar_select 0, %s24, %s22
  $region1: #{tpu_custom_call.1} parent=0
    #allocation2 [shape = 'u8[8192]{0}', space=vmem, size = 0x2000, scoped, tag = 'input window, operand 1']
    #allocation3 [shape = 's32[2]{0}', space=sflag, size = 0x8, scoped, tag = 'scoped memory for tpu_custom_call.1']
    #allocation4 [shape = 's32[2]{0}', space=sflag, size = 0x8, scoped, tag = 'scoped memory for tpu_custom_call.1']
    #allocation5 [shape = 'u8[8192]{0}', space=vmem, size = 0x2000, scoped, tag = 'input window, operand 2']
    #allocation6 [shape = 's32[2]{0}', space=sflag, size = 0x8, scoped, tag = 'scoped memory for tpu_custom_call.1']
    #allocation7 [shape = 'u8[8192]{0}', space=vmem, size = 0x2000, scoped, tag = 'input window, operand 3']
    #allocation8 [shape = 'u8[8192]{0}', space=vmem, size = 0x2000, scoped, tag = 'output window, operand 0']
    %26 = vsyncpa [#allocation3], 0
    %s27 = scalar_lea.sflag [#allocation3], 1
    %28 = vsyncpa %s27, 0
    %29 = vsyncpa [#allocation6], 0
    %s30 = scalar_lea.sflag [#allocation6], 1
    %31 = vsyncpa %s30, 0
    %32 = vsyncpa [#allocation4], 0
    %s33 = scalar_lea.sflag [#allocation4], 1
    %34 = vsyncpa %s33, 0
    loop: start=0, step=1, limit=4
    $region2: #{tpu_custom_call.1} parent=1 // loop_pre_header
      _
    $region3: #{tpu_custom_call.1} parent=1 // loop_header
      %s36 = sphi 0, %s40
      %p37 = scmp.ge.s32.totalorder %s36, 4
      %s46 = sphi 0, %s48
      %s49 = sphi 0, %s46
      %s50 = sphi 0, %s49
      %s66 = sphi 0, %s50
      %s72 = sphi 0, %s74
      %s75 = sphi 0, %s72
      %s76 = sphi 0, %s75
      %s92 = sphi 0, %s76
      %s98 = sphi 0, %s100
      %s101 = sphi 0, %s98
      %s102 = sphi 0, %s101
      %s118 = sphi 0, %s102
      %s124 = sphi 0, %s126
      %s127 = sphi 0, %s124
      %s128 = sphi 0, %s127
      %s144 = sphi 0, %s128
      %s150 = sphi 0, %s152
      %s153 = sphi 0, %s150
      %s154 = sphi 0, %s153
      %s170 = sphi 0, %s154
      %s174 = sphi 0, %s174
      %s176 = sphi 0, %s174
      %s177 = sphi 0, %s176
      %s191 = sphi 0, %s177
      %s195 = sphi 0, %s195
      %s197 = sphi 0, %s195
      %s198 = sphi 0, %s197
      %s212 = sphi 0, %s198
      %s216 = sphi 0, %s216
      %s218 = sphi 0, %s216
      %s219 = sphi 0, %s218
      %s233 = sphi 0, %s219
      %s237 = sphi 0, %s237
      %s239 = sphi 0, %s237
      %s240 = sphi 0, %s239
      %s254 = sphi 0, %s240
      %s258 = sphi 0, %s258
      %s260 = sphi 0, %s258
      %s261 = sphi 0, %s260
      %s275 = sphi 0, %s261
      %s279 = sphi 0, %s279
      %s281 = sphi 0, %s279
      %s282 = sphi 0, %s281
      %s296 = sphi 0, %s282
      %s300 = sphi 0, %s300
      %s302 = sphi 0, %s300
      %s303 = sphi 0, %s302
      %s317 = sphi 0, %s303
      %s321 = sphi 0, %s321
      %s323 = sphi 0, %s321
      %s324 = sphi 0, %s323
      %s338 = sphi 0, %s324
      %s342 = sphi 0, %s342
      %s344 = sphi 0, %s342
      %s345 = sphi 0, %s344
      %s359 = sphi 0, %s345
      %s363 = sphi 0, %s363
      %s365 = sphi 0, %s363
      %s366 = sphi 0, %s365
      %s380 = sphi 0, %s366
      %s384 = sphi 0, %s384
      %s386 = sphi 0, %s384
      %s387 = sphi 0, %s386
      %s401 = sphi 0, %s387
      %s405 = sphi 0, %s405
      %s407 = sphi 0, %s405
      %s408 = sphi 0, %s407
      %s422 = sphi 0, %s408
      %s426 = sphi 0, %s426
      %s428 = sphi 0, %s426
      %s429 = sphi 0, %s428
      %s443 = sphi 0, %s429
      %s447 = sphi 0, %s447
      %s449 = sphi 0, %s447
      %s450 = sphi 0, %s449
      %s464 = sphi 0, %s450
      %s468 = sphi 0, %s468
      %s470 = sphi 0, %s468
      %s471 = sphi 0, %s470
      %s485 = sphi 0, %s471
      %s489 = sphi 0, %s489
      %s491 = sphi 0, %s489
      %s492 = sphi 0, %s491
      %s506 = sphi 0, %s492
      %s512 = sphi 0, %s514
      %s515 = sphi 0, %s512
      %s516 = sphi 0, %s515
      %s532 = sphi 0, %s516
    $region4: #{tpu_custom_call.1} parent=1 // loop_header_branch
      %39 = sbr.rel (%p37) target = $region8
    $region5: #{tpu_custom_call.1} parent=1 // loop_body
      %s41 = ssub.s32 %s36, 1
      %s42 = ssub.s32 %s36, 2
      %s43 = sadd.s32 %s36, 1
      %s44 = ssub.s32 %s36, %s43
      %p45 = scmp.eq.s32.totalorder %s44, 0
      %s47 = sadd.s32 %s46, 1
      %s48 = scalar_select %p45, %s46, %s47
      %p51 = pneg %p45
      %p52 = scmp.eq.s32.totalorder %s36, 1
      %p53 = por %p51, %p52
      %p54 = scmp.ne.s32.totalorder %s46, %s49
      %p55 = scmp.eq.s32.totalorder %s36, 0
      %p56 = por %p54, %p55
      %p57 = scmp.ne.s32.totalorder %s46, %s49
      %p58 = scmp.eq.s32.totalorder %s41, 1
      %p59 = por %p57, %p58
      %p60 = scmp.ne.s32.totalorder %s49, %s50
      %p61 = scmp.eq.s32.totalorder %s41, 0
      %p62 = por %p60, %p61
      %p63 = scmp.ne.s32.totalorder %s49, %s50
      %p64 = scmp.eq.s32.totalorder %s42, 1
      %p65 = por %p63, %p64
      %p67 = scmp.ne.s32.totalorder %s50, %s66
      %p68 = scmp.eq.s32.totalorder %s42, 0
      %p69 = por %p67, %p68
      %s70 = ssub.s32 %s36, %s43
      %p71 = scmp.eq.s32.totalorder %s70, 0
      %s73 = sadd.s32 %s72, 1
      %s74 = scalar_select %p71, %s72, %s73
      %p77 = pneg %p71
      %p78 = scmp.eq.s32.totalorder %s36, 1
      %p79 = por %p77, %p78
      %p80 = scmp.ne.s32.totalorder %s72, %s75
      %p81 = scmp.eq.s32.totalorder %s36, 0
      %p82 = por %p80, %p81
      %p83 = scmp.ne.s32.totalorder %s72, %s75
      %p84 = scmp.eq.s32.totalorder %s41, 1
      %p85 = por %p83, %p84
      %p86 = scmp.ne.s32.totalorder %s75, %s76
      %p87 = scmp.eq.s32.totalorder %s41, 0
      %p88 = por %p86, %p87
      %p89 = scmp.ne.s32.totalorder %s75, %s76
      %p90 = scmp.eq.s32.totalorder %s42, 1
      %p91 = por %p89, %p90
      %p93 = scmp.ne.s32.totalorder %s76, %s92
      %p94 = scmp.eq.s32.totalorder %s42, 0
      %p95 = por %p93, %p94
      %s96 = ssub.s32 %s36, %s43
      %p97 = scmp.eq.s32.totalorder %s96, 0
      %s99 = sadd.s32 %s98, 1
      %s100 = scalar_select %p97, %s98, %s99
      %p103 = pneg %p97
      %p104 = scmp.eq.s32.totalorder %s36, 1
      %p105 = por %p103, %p104
      %p106 = scmp.ne.s32.totalorder %s98, %s101
      %p107 = scmp.eq.s32.totalorder %s36, 0
      %p108 = por %p106, %p107
      %p109 = scmp.ne.s32.totalorder %s98, %s101
      %p110 = scmp.eq.s32.totalorder %s41, 1
      %p111 = por %p109, %p110
      %p112 = scmp.ne.s32.totalorder %s101, %s102
      %p113 = scmp.eq.s32.totalorder %s41, 0
      %p114 = por %p112, %p113
      %p115 = scmp.ne.s32.totalorder %s101, %s102
      %p116 = scmp.eq.s32.totalorder %s42, 1
      %p117 = por %p115, %p116
      %p119 = scmp.ne.s32.totalorder %s102, %s118
      %p120 = scmp.eq.s32.totalorder %s42, 0
      %p121 = por %p119, %p120
      %s122 = ssub.s32 %s36, %s43
      %p123 = scmp.eq.s32.totalorder %s122, 0
      %s125 = sadd.s32 %s124, 1
      %s126 = scalar_select %p123, %s124, %s125
      %p129 = pneg %p123
      %p130 = scmp.eq.s32.totalorder %s36, 1
      %p131 = por %p129, %p130
      %p132 = scmp.ne.s32.totalorder %s124, %s127
      %p133 = scmp.eq.s32.totalorder %s36, 0
      %p134 = por %p132, %p133
      %p135 = scmp.ne.s32.totalorder %s124, %s127
      %p136 = scmp.eq.s32.totalorder %s41, 1
      %p137 = por %p135, %p136
      %p138 = scmp.ne.s32.totalorder %s127, %s128
      %p139 = scmp.eq.s32.totalorder %s41, 0
      %p140 = por %p138, %p139
      %p141 = scmp.ne.s32.totalorder %s127, %s128
      %p142 = scmp.eq.s32.totalorder %s42, 1
      %p143 = por %p141, %p142
      %p145 = scmp.ne.s32.totalorder %s128, %s144
      %p146 = scmp.eq.s32.totalorder %s42, 0
      %p147 = por %p145, %p146
      %s148 = ssub.s32 %s36, %s43
      %p149 = scmp.eq.s32.totalorder %s148, 0
      %s151 = sadd.s32 %s150, 1
      %s152 = scalar_select %p149, %s150, %s151
      %p155 = pneg %p149
      %p156 = scmp.eq.s32.totalorder %s36, 1
      %p157 = por %p155, %p156
      %p158 = scmp.ne.s32.totalorder %s150, %s153
      %p159 = scmp.eq.s32.totalorder %s36, 0
      %p160 = por %p158, %p159
      %p161 = scmp.ne.s32.totalorder %s150, %s153
      %p162 = scmp.eq.s32.totalorder %s41, 1
      %p163 = por %p161, %p162
      %p164 = scmp.ne.s32.totalorder %s153, %s154
      %p165 = scmp.eq.s32.totalorder %s41, 0
      %p166 = por %p164, %p165
      %p167 = scmp.ne.s32.totalorder %s153, %s154
      %p168 = scmp.eq.s32.totalorder %s42, 1
      %p169 = por %p167, %p168
      %p171 = scmp.ne.s32.totalorder %s154, %s170
      %p172 = scmp.eq.s32.totalorder %s42, 0
      %p173 = por %p171, %p172
      %s175 = sadd.s32 %s174, 1
      %p178 = scmp.eq.s32.totalorder %s36, 1
      %p179 = scmp.ne.s32.totalorder %s174, %s176
      %p180 = scmp.eq.s32.totalorder %s36, 0
      %p181 = por %p179, %p180
      %p182 = scmp.ne.s32.totalorder %s174, %s176
      %p183 = scmp.eq.s32.totalorder %s41, 1
      %p184 = por %p182, %p183
      %p185 = scmp.ne.s32.totalorder %s176, %s177
      %p186 = scmp.eq.s32.totalorder %s41, 0
      %p187 = por %p185, %p186
      %p188 = scmp.ne.s32.totalorder %s176, %s177
      %p189 = scmp.eq.s32.totalorder %s42, 1
      %p190 = por %p188, %p189
      %p192 = scmp.ne.s32.totalorder %s177, %s191
      %p193 = scmp.eq.s32.totalorder %s42, 0
      %p194 = por %p192, %p193
      %s196 = sadd.s32 %s195, 1
      %p199 = scmp.eq.s32.totalorder %s36, 1
      %p200 = scmp.ne.s32.totalorder %s195, %s197
      %p201 = scmp.eq.s32.totalorder %s36, 0
      %p202 = por %p200, %p201
      %p203 = scmp.ne.s32.totalorder %s195, %s197
      %p204 = scmp.eq.s32.totalorder %s41, 1
      %p205 = por %p203, %p204
      %p206 = scmp.ne.s32.totalorder %s197, %s198
      %p207 = scmp.eq.s32.totalorder %s41, 0
      %p208 = por %p206, %p207
      %p209 = scmp.ne.s32.totalorder %s197, %s198
      %p210 = scmp.eq.s32.totalorder %s42, 1
      %p211 = por %p209, %p210
      %p213 = scmp.ne.s32.totalorder %s198, %s212
      %p214 = scmp.eq.s32.totalorder %s42, 0
      %p215 = por %p213, %p214
      %s217 = sadd.s32 %s216, 1
      %p220 = scmp.eq.s32.totalorder %s36, 1
      %p221 = scmp.ne.s32.totalorder %s216, %s218
      %p222 = scmp.eq.s32.totalorder %s36, 0
      %p223 = por %p221, %p222
      %p224 = scmp.ne.s32.totalorder %s216, %s218
      %p225 = scmp.eq.s32.totalorder %s41, 1
      %p226 = por %p224, %p225
      %p227 = scmp.ne.s32.totalorder %s218, %s219
      %p228 = scmp.eq.s32.totalorder %s41, 0
      %p229 = por %p227, %p228
      %p230 = scmp.ne.s32.totalorder %s218, %s219
      %p231 = scmp.eq.s32.totalorder %s42, 1
      %p232 = por %p230, %p231
      %p234 = scmp.ne.s32.totalorder %s219, %s233
      %p235 = scmp.eq.s32.totalorder %s42, 0
      %p236 = por %p234, %p235
      %s238 = sadd.s32 %s237, 1
      %p241 = scmp.eq.s32.totalorder %s36, 1
      %p242 = scmp.ne.s32.totalorder %s237, %s239
      %p243 = scmp.eq.s32.totalorder %s36, 0
      %p244 = por %p242, %p243
      %p245 = scmp.ne.s32.totalorder %s237, %s239
      %p246 = scmp.eq.s32.totalorder %s41, 1
      %p247 = por %p245, %p246
      %p248 = scmp.ne.s32.totalorder %s239, %s240
      %p249 = scmp.eq.s32.totalorder %s41, 0
      %p250 = por %p248, %p249
      %p251 = scmp.ne.s32.totalorder %s239, %s240
      %p252 = scmp.eq.s32.totalorder %s42, 1
      %p253 = por %p251, %p252
      %p255 = scmp.ne.s32.totalorder %s240, %s254
      %p256 = scmp.eq.s32.totalorder %s42, 0
      %p257 = por %p255, %p256
      %s259 = sadd.s32 %s258, 1
      %p262 = scmp.eq.s32.totalorder %s36, 1
      %p263 = scmp.ne.s32.totalorder %s258, %s260
      %p264 = scmp.eq.s32.totalorder %s36, 0
      %p265 = por %p263, %p264
      %p266 = scmp.ne.s32.totalorder %s258, %s260
      %p267 = scmp.eq.s32.totalorder %s41, 1
      %p268 = por %p266, %p267
      %p269 = scmp.ne.s32.totalorder %s260, %s261
      %p270 = scmp.eq.s32.totalorder %s41, 0
      %p271 = por %p269, %p270
      %p272 = scmp.ne.s32.totalorder %s260, %s261
      %p273 = scmp.eq.s32.totalorder %s42, 1
      %p274 = por %p272, %p273
      %p276 = scmp.ne.s32.totalorder %s261, %s275
      %p277 = scmp.eq.s32.totalorder %s42, 0
      %p278 = por %p276, %p277
      %s280 = sadd.s32 %s279, 1
      %p283 = scmp.eq.s32.totalorder %s36, 1
      %p284 = scmp.ne.s32.totalorder %s279, %s281
      %p285 = scmp.eq.s32.totalorder %s36, 0
      %p286 = por %p284, %p285
      %p287 = scmp.ne.s32.totalorder %s279, %s281
      %p288 = scmp.eq.s32.totalorder %s41, 1
      %p289 = por %p287, %p288
      %p290 = scmp.ne.s32.totalorder %s281, %s282
      %p291 = scmp.eq.s32.totalorder %s41, 0
      %p292 = por %p290, %p291
      %p293 = scmp.ne.s32.totalorder %s281, %s282
      %p294 = scmp.eq.s32.totalorder %s42, 1
      %p295 = por %p293, %p294
      %p297 = scmp.ne.s32.totalorder %s282, %s296
      %p298 = scmp.eq.s32.totalorder %s42, 0
      %p299 = por %p297, %p298
      %s301 = sadd.s32 %s300, 1
      %p304 = scmp.eq.s32.totalorder %s36, 1
      %p305 = scmp.ne.s32.totalorder %s300, %s302
      %p306 = scmp.eq.s32.totalorder %s36, 0
      %p307 = por %p305, %p306
      %p308 = scmp.ne.s32.totalorder %s300, %s302
      %p309 = scmp.eq.s32.totalorder %s41, 1
      %p310 = por %p308, %p309
      %p311 = scmp.ne.s32.totalorder %s302, %s303
      %p312 = scmp.eq.s32.totalorder %s41, 0
      %p313 = por %p311, %p312
      %p314 = scmp.ne.s32.totalorder %s302, %s303
      %p315 = scmp.eq.s32.totalorder %s42, 1
      %p316 = por %p314, %p315
      %p318 = scmp.ne.s32.totalorder %s303, %s317
      %p319 = scmp.eq.s32.totalorder %s42, 0
      %p320 = por %p318, %p319
      %s322 = sadd.s32 %s321, 1
      %p325 = scmp.eq.s32.totalorder %s36, 1
      %p326 = scmp.ne.s32.totalorder %s321, %s323
      %p327 = scmp.eq.s32.totalorder %s36, 0
      %p328 = por %p326, %p327
      %p329 = scmp.ne.s32.totalorder %s321, %s323
      %p330 = scmp.eq.s32.totalorder %s41, 1
      %p331 = por %p329, %p330
      %p332 = scmp.ne.s32.totalorder %s323, %s324
      %p333 = scmp.eq.s32.totalorder %s41, 0
      %p334 = por %p332, %p333
      %p335 = scmp.ne.s32.totalorder %s323, %s324
      %p336 = scmp.eq.s32.totalorder %s42, 1
      %p337 = por %p335, %p336
      %p339 = scmp.ne.s32.totalorder %s324, %s338
      %p340 = scmp.eq.s32.totalorder %s42, 0
      %p341 = por %p339, %p340
      %s343 = sadd.s32 %s342, 1
      %p346 = scmp.eq.s32.totalorder %s36, 1
      %p347 = scmp.ne.s32.totalorder %s342, %s344
      %p348 = scmp.eq.s32.totalorder %s36, 0
      %p349 = por %p347, %p348
      %p350 = scmp.ne.s32.totalorder %s342, %s344
      %p351 = scmp.eq.s32.totalorder %s41, 1
      %p352 = por %p350, %p351
      %p353 = scmp.ne.s32.totalorder %s344, %s345
      %p354 = scmp.eq.s32.totalorder %s41, 0
      %p355 = por %p353, %p354
      %p356 = scmp.ne.s32.totalorder %s344, %s345
      %p357 = scmp.eq.s32.totalorder %s42, 1
      %p358 = por %p356, %p357
      %p360 = scmp.ne.s32.totalorder %s345, %s359
      %p361 = scmp.eq.s32.totalorder %s42, 0
      %p362 = por %p360, %p361
      %s364 = sadd.s32 %s363, 1
      %p367 = scmp.eq.s32.totalorder %s36, 1
      %p368 = scmp.ne.s32.totalorder %s363, %s365
      %p369 = scmp.eq.s32.totalorder %s36, 0
      %p370 = por %p368, %p369
      %p371 = scmp.ne.s32.totalorder %s363, %s365
      %p372 = scmp.eq.s32.totalorder %s41, 1
      %p373 = por %p371, %p372
      %p374 = scmp.ne.s32.totalorder %s365, %s366
      %p375 = scmp.eq.s32.totalorder %s41, 0
      %p376 = por %p374, %p375
      %p377 = scmp.ne.s32.totalorder %s365, %s366
      %p378 = scmp.eq.s32.totalorder %s42, 1
      %p379 = por %p377, %p378
      %p381 = scmp.ne.s32.totalorder %s366, %s380
      %p382 = scmp.eq.s32.totalorder %s42, 0
      %p383 = por %p381, %p382
      %s385 = sadd.s32 %s384, 1
      %p388 = scmp.eq.s32.totalorder %s36, 1
      %p389 = scmp.ne.s32.totalorder %s384, %s386
      %p390 = scmp.eq.s32.totalorder %s36, 0
      %p391 = por %p389, %p390
      %p392 = scmp.ne.s32.totalorder %s384, %s386
      %p393 = scmp.eq.s32.totalorder %s41, 1
      %p394 = por %p392, %p393
      %p395 = scmp.ne.s32.totalorder %s386, %s387
      %p396 = scmp.eq.s32.totalorder %s41, 0
      %p397 = por %p395, %p396
      %p398 = scmp.ne.s32.totalorder %s386, %s387
      %p399 = scmp.eq.s32.totalorder %s42, 1
      %p400 = por %p398, %p399
      %p402 = scmp.ne.s32.totalorder %s387, %s401
      %p403 = scmp.eq.s32.totalorder %s42, 0
      %p404 = por %p402, %p403
      %s406 = sadd.s32 %s405, 1
      %p409 = scmp.eq.s32.totalorder %s36, 1
      %p410 = scmp.ne.s32.totalorder %s405, %s407
      %p411 = scmp.eq.s32.totalorder %s36, 0
      %p412 = por %p410, %p411
      %p413 = scmp.ne.s32.totalorder %s405, %s407
      %p414 = scmp.eq.s32.totalorder %s41, 1
      %p415 = por %p413, %p414
      %p416 = scmp.ne.s32.totalorder %s407, %s408
      %p417 = scmp.eq.s32.totalorder %s41, 0
      %p418 = por %p416, %p417
      %p419 = scmp.ne.s32.totalorder %s407, %s408
      %p420 = scmp.eq.s32.totalorder %s42, 1
      %p421 = por %p419, %p420
      %p423 = scmp.ne.s32.totalorder %s408, %s422
      %p424 = scmp.eq.s32.totalorder %s42, 0
      %p425 = por %p423, %p424
      %s427 = sadd.s32 %s426, 1
      %p430 = scmp.eq.s32.totalorder %s36, 1
      %p431 = scmp.ne.s32.totalorder %s426, %s428
      %p432 = scmp.eq.s32.totalorder %s36, 0
      %p433 = por %p431, %p432
      %p434 = scmp.ne.s32.totalorder %s426, %s428
      %p435 = scmp.eq.s32.totalorder %s41, 1
      %p436 = por %p434, %p435
      %p437 = scmp.ne.s32.totalorder %s428, %s429
      %p438 = scmp.eq.s32.totalorder %s41, 0
      %p439 = por %p437, %p438
      %p440 = scmp.ne.s32.totalorder %s428, %s429
      %p441 = scmp.eq.s32.totalorder %s42, 1
      %p442 = por %p440, %p441
      %p444 = scmp.ne.s32.totalorder %s429, %s443
      %p445 = scmp.eq.s32.totalorder %s42, 0
      %p446 = por %p444, %p445
      %s448 = sadd.s32 %s447, 1
      %p451 = scmp.eq.s32.totalorder %s36, 1
      %p452 = scmp.ne.s32.totalorder %s447, %s449
      %p453 = scmp.eq.s32.totalorder %s36, 0
      %p454 = por %p452, %p453
      %p455 = scmp.ne.s32.totalorder %s447, %s449
      %p456 = scmp.eq.s32.totalorder %s41, 1
      %p457 = por %p455, %p456
      %p458 = scmp.ne.s32.totalorder %s449, %s450
      %p459 = scmp.eq.s32.totalorder %s41, 0
      %p460 = por %p458, %p459
      %p461 = scmp.ne.s32.totalorder %s449, %s450
      %p462 = scmp.eq.s32.totalorder %s42, 1
      %p463 = por %p461, %p462
      %p465 = scmp.ne.s32.totalorder %s450, %s464
      %p466 = scmp.eq.s32.totalorder %s42, 0
      %p467 = por %p465, %p466
      %s469 = sadd.s32 %s468, 1
      %p472 = scmp.eq.s32.totalorder %s36, 1
      %p473 = scmp.ne.s32.totalorder %s468, %s470
      %p474 = scmp.eq.s32.totalorder %s36, 0
      %p475 = por %p473, %p474
      %p476 = scmp.ne.s32.totalorder %s468, %s470
      %p477 = scmp.eq.s32.totalorder %s41, 1
      %p478 = por %p476, %p477
      %p479 = scmp.ne.s32.totalorder %s470, %s471
      %p480 = scmp.eq.s32.totalorder %s41, 0
      %p481 = por %p479, %p480
      %p482 = scmp.ne.s32.totalorder %s470, %s471
      %p483 = scmp.eq.s32.totalorder %s42, 1
      %p484 = por %p482, %p483
      %p486 = scmp.ne.s32.totalorder %s471, %s485
      %p487 = scmp.eq.s32.totalorder %s42, 0
      %p488 = por %p486, %p487
      %s490 = sadd.s32 %s489, 1
      %p493 = scmp.eq.s32.totalorder %s36, 1
      %p494 = scmp.ne.s32.totalorder %s489, %s491
      %p495 = scmp.eq.s32.totalorder %s36, 0
      %p496 = por %p494, %p495
      %p497 = scmp.ne.s32.totalorder %s489, %s491
      %p498 = scmp.eq.s32.totalorder %s41, 1
      %p499 = por %p497, %p498
      %p500 = scmp.ne.s32.totalorder %s491, %s492
      %p501 = scmp.eq.s32.totalorder %s41, 0
      %p502 = por %p500, %p501
      %p503 = scmp.ne.s32.totalorder %s491, %s492
      %p504 = scmp.eq.s32.totalorder %s42, 1
      %p505 = por %p503, %p504
      %p507 = scmp.ne.s32.totalorder %s492, %s506
      %p508 = scmp.eq.s32.totalorder %s42, 0
      %p509 = por %p507, %p508
      %s510 = ssub.s32 %s36, %s43
      %p511 = scmp.eq.s32.totalorder %s510, 0
      %s513 = sadd.s32 %s512, 1
      %s514 = scalar_select %p511, %s512, %s513
      %p517 = pneg %p511
      %p518 = scmp.eq.s32.totalorder %s36, 1
      %p519 = por %p517, %p518
      %p520 = scmp.ne.s32.totalorder %s512, %s515
      %p521 = scmp.eq.s32.totalorder %s36, 0
      %p522 = por %p520, %p521
      %p523 = scmp.ne.s32.totalorder %s512, %s515
      %p524 = scmp.eq.s32.totalorder %s41, 1
      %p525 = por %p523, %p524
      %p526 = scmp.ne.s32.totalorder %s515, %s516
      %p527 = scmp.eq.s32.totalorder %s41, 0
      %p528 = por %p526, %p527
      %p529 = scmp.ne.s32.totalorder %s515, %s516
      %p530 = scmp.eq.s32.totalorder %s42, 1
      %p531 = por %p529, %p530
      %p533 = scmp.ne.s32.totalorder %s516, %s532
      %p534 = scmp.eq.s32.totalorder %s42, 0
      %p535 = por %p533, %p534
      %p536 = scmp.le.s32.totalorder 1, %s36
      %p537 = scmp.lt.s32.totalorder %s36, 3
      %p538 = pnand %p536, %p537
      %p539 = pneg %p538
      // Predicated region
      $region9: #{tpu_custom_call.1} parent=5 // pred_check
        _
      $region10: #{tpu_custom_call.1} parent=5 // pred_check_branch
        %541 = sbr.rel (%p538) target = $region12
      $region11: #{tpu_custom_call.1} parent=5 // pred_region
        %s542 = ssub.s32 %s36, 1
        // Predicated region
        $region13: #{tpu_custom_call.1} parent=11 // pred_check
          %p543 = pneg %p187
        $region14: #{tpu_custom_call.1} parent=11 // pred_check_branch
          %545 = sbr.rel (%p543) target = $region16
        $region15: #{tpu_custom_call.1} parent=11 // pred_region
          _
        $region16: #{tpu_custom_call.1} parent=11 // pred_fallthru
          _
        // Predicated region
        $region17: #{tpu_custom_call.1} parent=11 // pred_check
          %p546 = pneg %p208
        $region18: #{tpu_custom_call.1} parent=11 // pred_check_branch
          %548 = sbr.rel (%p546) target = $region20
        $region19: #{tpu_custom_call.1} parent=11 // pred_region
          _
        $region20: #{tpu_custom_call.1} parent=11 // pred_fallthru
          _
        // Predicated region
        $region21: #{tpu_custom_call.1} parent=11 // pred_check
          %p549 = pneg %p229
        $region22: #{tpu_custom_call.1} parent=11 // pred_check_branch
          %551 = sbr.rel (%p549) target = $region24
        $region23: #{tpu_custom_call.1} parent=11 // pred_region
          _
        $region24: #{tpu_custom_call.1} parent=11 // pred_fallthru
          _
        // Predicated region
        $region25: #{tpu_custom_call.1} parent=11 // pred_check
          %p552 = pneg %p250
        $region26: #{tpu_custom_call.1} parent=11 // pred_check_branch
          %554 = sbr.rel (%p552) target = $region28
        $region27: #{tpu_custom_call.1} parent=11 // pred_region
          _
        $region28: #{tpu_custom_call.1} parent=11 // pred_fallthru
          _
        // Predicated region
        $region29: #{tpu_custom_call.1} parent=11 // pred_check
          %p555 = pneg %p271
        $region30: #{tpu_custom_call.1} parent=11 // pred_check_branch
          %557 = sbr.rel (%p555) target = $region32
        $region31: #{tpu_custom_call.1} parent=11 // pred_region
          _
        $region32: #{tpu_custom_call.1} parent=11 // pred_fallthru
          _
        // Predicated region
        $region33: #{tpu_custom_call.1} parent=11 // pred_check
          %p558 = pneg %p292
        $region34: #{tpu_custom_call.1} parent=11 // pred_check_branch
          %560 = sbr.rel (%p558) target = $region36
        $region35: #{tpu_custom_call.1} parent=11 // pred_region
          _
        $region36: #{tpu_custom_call.1} parent=11 // pred_fallthru
          _
        // Predicated region
        $region37: #{tpu_custom_call.1} parent=11 // pred_check
          %p561 = pneg %p313
        $region38: #{tpu_custom_call.1} parent=11 // pred_check_branch
          %563 = sbr.rel (%p561) target = $region40
        $region39: #{tpu_custom_call.1} parent=11 // pred_region
          _
        $region40: #{tpu_custom_call.1} parent=11 // pred_fallthru
          _
        // Predicated region
        $region41: #{tpu_custom_call.1} parent=11 // pred_check
          %p564 = pneg %p334
        $region42: #{tpu_custom_call.1} parent=11 // pred_check_branch
          %566 = sbr.rel (%p564) target = $region44
        $region43: #{tpu_custom_call.1} parent=11 // pred_region
          _
        $region44: #{tpu_custom_call.1} parent=11 // pred_fallthru
          _
        // Predicated region
        $region45: #{tpu_custom_call.1} parent=11 // pred_check
          %p567 = pneg %p355
        $region46: #{tpu_custom_call.1} parent=11 // pred_check_branch
          %569 = sbr.rel (%p567) target = $region48
        $region47: #{tpu_custom_call.1} parent=11 // pred_region
          _
        $region48: #{tpu_custom_call.1} parent=11 // pred_fallthru
          _
        // Predicated region
        $region49: #{tpu_custom_call.1} parent=11 // pred_check
          %p570 = pneg %p376
        $region50: #{tpu_custom_call.1} parent=11 // pred_check_branch
          %572 = sbr.rel (%p570) target = $region52
        $region51: #{tpu_custom_call.1} parent=11 // pred_region
          _
        $region52: #{tpu_custom_call.1} parent=11 // pred_fallthru
          _
        // Predicated region
        $region53: #{tpu_custom_call.1} parent=11 // pred_check
          %p573 = pneg %p397
        $region54: #{tpu_custom_call.1} parent=11 // pred_check_branch
          %575 = sbr.rel (%p573) target = $region56
        $region55: #{tpu_custom_call.1} parent=11 // pred_region
          _
        $region56: #{tpu_custom_call.1} parent=11 // pred_fallthru
          _
        // Predicated region
        $region57: #{tpu_custom_call.1} parent=11 // pred_check
          %p576 = pneg %p418
        $region58: #{tpu_custom_call.1} parent=11 // pred_check_branch
          %578 = sbr.rel (%p576) target = $region60
        $region59: #{tpu_custom_call.1} parent=11 // pred_region
          _
        $region60: #{tpu_custom_call.1} parent=11 // pred_fallthru
          _
        // Predicated region
        $region61: #{tpu_custom_call.1} parent=11 // pred_check
          %p579 = pneg %p439
        $region62: #{tpu_custom_call.1} parent=11 // pred_check_branch
          %581 = sbr.rel (%p579) target = $region64
        $region63: #{tpu_custom_call.1} parent=11 // pred_region
          _
        $region64: #{tpu_custom_call.1} parent=11 // pred_fallthru
          _
        // Predicated region
        $region65: #{tpu_custom_call.1} parent=11 // pred_check
          %p582 = pneg %p460
        $region66: #{tpu_custom_call.1} parent=11 // pred_check_branch
          %584 = sbr.rel (%p582) target = $region68
        $region67: #{tpu_custom_call.1} parent=11 // pred_region
          _
        $region68: #{tpu_custom_call.1} parent=11 // pred_fallthru
          _
        // Predicated region
        $region69: #{tpu_custom_call.1} parent=11 // pred_check
          %p585 = pneg %p481
        $region70: #{tpu_custom_call.1} parent=11 // pred_check_branch
          %587 = sbr.rel (%p585) target = $region72
        $region71: #{tpu_custom_call.1} parent=11 // pred_region
          _
        $region72: #{tpu_custom_call.1} parent=11 // pred_fallthru
          _
        // Predicated region
        $region73: #{tpu_custom_call.1} parent=11 // pred_check
          %p588 = pneg %p502
        $region74: #{tpu_custom_call.1} parent=11 // pred_check_branch
          %590 = sbr.rel (%p588) target = $region76
        $region75: #{tpu_custom_call.1} parent=11 // pred_region
          _
        $region76: #{tpu_custom_call.1} parent=11 // pred_fallthru
          _
      $region12: #{tpu_custom_call.1} parent=5 // pred_fallthru
        _
      %p591 = scmp.lt.s32.totalorder %s36, 2
      // Predicated region
      $region77: #{tpu_custom_call.1} parent=5 // pred_check
        %p592 = pneg %p591
      $region78: #{tpu_custom_call.1} parent=5 // pred_check_branch
        %594 = sbr.rel (%p592) target = $region80
      $region79: #{tpu_custom_call.1} parent=5 // pred_region
        // Predicated region
        $region81: #{tpu_custom_call.1} parent=79 // pred_check
          %p595 = pneg %p56
        $region82: #{tpu_custom_call.1} parent=79 // pred_check_branch
          %597 = sbr.rel (%p595) target = $region84
        $region83: #{tpu_custom_call.1} parent=79 // pred_region
          %p598 = scmp.lt.s32.totalorder %s36, 1
          %s599 = scalar_select %p598, %s36, 1
          %s600 = smul.addr %s599, 8
          %s601 = scalar_lea.vmem %s0, %s600
        $region84: #{tpu_custom_call.1} parent=79 // pred_fallthru
          _
        // Predicated region
        $region85: #{tpu_custom_call.1} parent=79 // pred_check
          %p602 = pneg %p82
        $region86: #{tpu_custom_call.1} parent=79 // pred_check_branch
          %604 = sbr.rel (%p602) target = $region88
        $region87: #{tpu_custom_call.1} parent=79 // pred_region
          %s605 = sand.u32 %s72, 1
          %s606 = scalar_lea.sflag [#allocation3], %s605
          %s607 = sand.u32 %s72, 1
          %s608 = smul.addr %s607, 8
          %s609 = scalar_lea.vmem [#allocation2], %s608
          %s611 = ssub.s32 128, 128
          %612 = vsyncadd %s606, %s611
          %s613 = smul.addr %s36, 128
          %s614 = scalar_lea.hbm %s1, %s613
          %s616 = sshll.u32 %s609, 4
          %s617 = int_to_ptr.vmem [resolvable:$true] %s616
          %619 = dma.hbm_to_vmem [thread:$0]  %s614, 128, %s617, %s606
        $region88: #{tpu_custom_call.1} parent=79 // pred_fallthru
          _
        // Predicated region
        $region89: #{tpu_custom_call.1} parent=79 // pred_check
          %p620 = pneg %p108
        $region90: #{tpu_custom_call.1} parent=79 // pred_check_branch
          %622 = sbr.rel (%p620) target = $region92
        $region91: #{tpu_custom_call.1} parent=79 // pred_region
          %s623 = sand.u32 %s36, 1
          %s624 = scalar_lea.sflag [#allocation6], %s623
          %s625 = sand.u32 %s98, 1
          %s626 = smul.addr %s625, 8
          %s627 = scalar_lea.vmem [#allocation5], %s626
          %s629 = ssub.s32 128, 128
          %630 = vsyncadd %s624, %s629
          %s631 = smul.addr %s36, 128
          %s632 = scalar_lea.hbm %s2, %s631
          %s634 = sshll.u32 %s627, 4
          %s635 = int_to_ptr.vmem [resolvable:$true] %s634
          %637 = dma.hbm_to_vmem [thread:$0]  %s632, 128, %s635, %s624
        $region92: #{tpu_custom_call.1} parent=79 // pred_fallthru
          _
        // Predicated region
        $region93: #{tpu_custom_call.1} parent=79 // pred_check
          %p638 = pneg %p134
        $region94: #{tpu_custom_call.1} parent=79 // pred_check_branch
          %640 = sbr.rel (%p638) target = $region96
        $region95: #{tpu_custom_call.1} parent=79 // pred_region
          %s641 = sand.u32 %s36, 1
          %s642 = scalar_lea.sflag [#allocation6], %s641
          %s643 = sand.u32 %s124, 1
          %s644 = smul.addr %s643, 8
          %s645 = scalar_lea.vmem [#allocation7], %s644
          %s647 = ssub.s32 128, 128
          %648 = vsyncadd %s642, %s647
          %s649 = smul.addr %s36, 128
          %s650 = scalar_lea.hbm %s3, %s649
          %s652 = sshll.u32 %s645, 4
          %s653 = int_to_ptr.vmem [resolvable:$true] %s652
          %655 = dma.hbm_to_vmem [thread:$0]  %s650, 128, %s653, %s642
        $region96: #{tpu_custom_call.1} parent=79 // pred_fallthru
          _
        // Predicated region
        $region97: #{tpu_custom_call.1} parent=79 // pred_check
          %p656 = pneg %p160
        $region98: #{tpu_custom_call.1} parent=79 // pred_check_branch
          %658 = sbr.rel (%p656) target = $region100
        $region99: #{tpu_custom_call.1} parent=79 // pred_region
          %p659 = scmp.lt.s32.totalorder %s36, 1
          %s660 = scalar_select %p659, %s36, 1
          %s661 = smul.addr %s660, 8
          %s662 = scalar_lea.vmem %s4, %s661
        $region100: #{tpu_custom_call.1} parent=79 // pred_fallthru
          _
      $region80: #{tpu_custom_call.1} parent=5 // pred_fallthru
        _
      %p663 = scmp.le.s32.totalorder 1, %s36
      %p664 = scmp.lt.s32.totalorder %s36, 3
      %p665 = pnand %p663, %p664
      %p666 = pneg %p665
      // Predicated region
      $region101: #{tpu_custom_call.1} parent=5 // pred_check
        _
      $region102: #{tpu_custom_call.1} parent=5 // pred_check_branch
        %668 = sbr.rel (%p665) target = $region104
      $region103: #{tpu_custom_call.1} parent=5 // pred_region
        %s669 = ssub.s32 %s36, 1
        %s670 = sand.u32 %s75, 1
        %s671 = scalar_lea.sflag [#allocation3], %s670
        %s672 = sand.u32 %s75, 1
        %s673 = smul.addr %s672, 8
        %s674 = scalar_lea.vmem [#allocation2], %s673
        // Predicated region
        $region105: #{tpu_custom_call.1} parent=103 // pred_check
          %p675 = pneg %p88
        $region106: #{tpu_custom_call.1} parent=103 // pred_check_branch
          %677 = sbr.rel (%p675) target = $region108
        $region107: #{tpu_custom_call.1} parent=103 // pred_region
          %678 = dma.done %s671, 128
        $region108: #{tpu_custom_call.1} parent=103 // pred_fallthru
          _
        %s679 = sand.u32 %s41, 1
        %s680 = scalar_lea.sflag [#allocation6], %s679
        %s681 = sand.u32 %s101, 1
        %s682 = smul.addr %s681, 8
        %s683 = scalar_lea.vmem [#allocation5], %s682
        // Predicated region
        $region109: #{tpu_custom_call.1} parent=103 // pred_check
          %p684 = pneg %p114
        $region110: #{tpu_custom_call.1} parent=103 // pred_check_branch
          %686 = sbr.rel (%p684) target = $region112
        $region111: #{tpu_custom_call.1} parent=103 // pred_region
          %687 = dma.done %s680, 128
        $region112: #{tpu_custom_call.1} parent=103 // pred_fallthru
          _
        %s688 = sand.u32 %s41, 1
        %s689 = scalar_lea.sflag [#allocation6], %s688
        %s690 = sand.u32 %s127, 1
        %s691 = smul.addr %s690, 8
        %s692 = scalar_lea.vmem [#allocation7], %s691
        // Predicated region
        $region113: #{tpu_custom_call.1} parent=103 // pred_check
          %p693 = pneg %p140
        $region114: #{tpu_custom_call.1} parent=103 // pred_check_branch
          %695 = sbr.rel (%p693) target = $region116
        $region115: #{tpu_custom_call.1} parent=103 // pred_region
          %696 = dma.done %s689, 128
        $region116: #{tpu_custom_call.1} parent=103 // pred_fallthru
          _
        %p697 = scmp.lt.s32.totalorder %s41, 1
        %s698 = scalar_select %p697, %s41, 1
        %s699 = smul.addr %s698, 8
        %s700 = scalar_lea.vmem %s0, %s699
        %p701 = pneg %p62
        %p702 = pneg %p59
        %s703 = sand.u32 %s75, 1
        %s704 = scalar_lea.sflag [#allocation3], %s703
        %s705 = sand.u32 %s75, 1
        %s706 = smul.addr %s705, 8
        %s707 = scalar_lea.vmem [#allocation2], %s706
        %p708 = pneg %p88
        %p709 = pneg %p85
        %s710 = sand.u32 %s41, 1
        %s711 = scalar_lea.sflag [#allocation6], %s710
        %s712 = sand.u32 %s101, 1
        %s713 = smul.addr %s712, 8
        %s714 = scalar_lea.vmem [#allocation5], %s713
        %p715 = pneg %p114
        %p716 = pneg %p111
        %s717 = sand.u32 %s41, 1
        %s718 = scalar_lea.sflag [#allocation6], %s717
        %s719 = sand.u32 %s127, 1
        %s720 = smul.addr %s719, 8
        %s721 = scalar_lea.vmem [#allocation7], %s720
        %p722 = pneg %p140
        %p723 = pneg %p137
        %p724 = scmp.lt.s32.totalorder %s41, 1
        %s725 = scalar_select %p724, %s41, 1
        %s726 = smul.addr %s725, 8
        %s727 = scalar_lea.vmem %s4, %s726
        %p728 = pneg %p166
        %p729 = pneg %p163
        %p730 = pneg %p187
        %p731 = pneg %p184
        %p732 = pneg %p208
        %p733 = pneg %p205
        %p734 = pneg %p229
        %p735 = pneg %p226
        %p736 = pneg %p250
        %p737 = pneg %p247
        %p738 = pneg %p271
        %p739 = pneg %p268
        %p740 = pneg %p292
        %p741 = pneg %p289
        %p742 = pneg %p313
        %p743 = pneg %p310
        %p744 = pneg %p334
        %p745 = pneg %p331
        %p746 = pneg %p355
        %p747 = pneg %p352
        %p748 = pneg %p376
        %p749 = pneg %p373
        %p750 = pneg %p397
        %p751 = pneg %p394
        %p752 = pneg %p418
        %p753 = pneg %p415
        %p754 = pneg %p439
        %p755 = pneg %p436
        %p756 = pneg %p460
        %p757 = pneg %p457
        %p758 = pneg %p481
        %p759 = pneg %p478
        %p760 = pneg %p502
        %p761 = pneg %p499
        %p762 = pneg %p528
        %p763 = pneg %p525
        %s764 = sand.u32 %s515, 1
        %s765 = scalar_lea.sflag [#allocation4], %s764
        %s766 = sand.u32 %s515, 1
        %s767 = smul.addr %s766, 8
        %s768 = scalar_lea.vmem [#allocation8], %s767
        %p769 = scmp.lt.s32.totalorder %s41, 1
        %s770 = scalar_select %p769, %s41, 1
        %s771 = smul.addr %s770, 8
        %s772 = scalar_lea.vmem %s0, %s771
        %p773 = scmp.lt.s32.totalorder %s41, 1
        %s774 = scalar_select %p773, %s41, 1
        %s775 = smul.addr %s774, 8
        %s776 = scalar_lea.vmem %s4, %s775
        %v777 = vld [vmem:[%s772] sm:$0xff]
        %vm778 = vcmp.ge.f32.partialorder %v777, 0.0
        %v779 = vmul.f32 %v777, 0.1
        %v780 = vsel %vm778, %v777, %v779
        %v782 = vrot.slane %v780, 7
        %vm784 = vcmask 1040384
        %v785 = vsel %vm784, 0.0, %v782
        %v786 = vsel %vm784, %v782, 0.0
        %vm789 = vcmask 1046528
        %v790 = vrot.slane %v785, 1
        %v791 = vrot.slane %v786, 1
        %v792 = vsel %vm789, %v790, %v791
        %793 = vrot.lane.b32.xlu0 %v792, 8
        %v794 = vpop.permute.xlu0 %793
        %vm796 = vcmask 1045504
        %v797 = vrot.slane %v785, 2
        %v798 = vrot.slane %v786, 2
        %v799 = vsel %vm796, %v797, %v798
        %800 = vrot.lane.b32.xlu0 %v799, 16
        %v801 = vpop.permute.xlu0 %800
        %vm803 = vcmask 64512
        %v804 = vsel %vm803, %v785, %v794
        %vm805 = vcmask 130048
        %v806 = vsel %vm805, %v804, %v801
        %v807 = vld [vmem:[%s5] sm:$0xff]
        %v808 = vld [vmem:[%s5 + $0x8] sm:$0xff]
        %v809 = vld [vmem:[%s5 + $0x10] sm:$0xff]
        %v810 = vld [vmem:[%s6] sm:$0x1]
        %v812 = vlaneseq
        %v813 = vshrl.u32 %v812, 7
        %v814 = vsub.s32 0, %v813
        %v815 = vrot.slane %v810, %v814
        %vm817 = vcmask 195584
        %v819 = vsel %vm817, %v806, 0
        %821 = vmatprep.subr.mxu0 0.0
        %822 = vmatpush1.msra.mxu0 %v807
        %823 = vmatprep.subr.mxu0 0.0
        %824 = vmatpush1.msra.mxu0 %v808
        %825 = vmatprep.subr.mxu0 0.0
        %826 = vmatpush1.msra.mxu0 %v809
        %827 = vmatprep.subr.mxu0 0.0
        %828 = vmatpush1.msra.mxu0 0.0
        %829 = vmatprep.subr.mxu0 0.0
        %830 = vmatpush1.msra.mxu0 0.0
        %831 = vmatprep.subr.mxu0 0.0
        %832 = vmatpush1.msra.mxu0 0.0
        %833 = vmatprep.subr.mxu0 0.0
        %834 = vmatpush1.msra.mxu0 0.0
        %835 = vmatprep.subr.mxu0 0.0
        %836 = vmatpush1.msra.mxu0 0.0
        %837 = vmatprep.subr.mxu0 0.0
        %838 = vmatpush1.msra.mxu0 0.0
        %839 = vmatprep.subr.mxu0 0.0
        %840 = vmatpush1.msra.mxu0 0.0
        %841 = vmatprep.subr.mxu0 0.0
        %842 = vmatpush1.msra.mxu0 0.0
        %843 = vmatprep.subr.mxu0 0.0
        %844 = vmatpush1.msra.mxu0 0.0
        %845 = vmatprep.subr.mxu0 0.0
        %846 = vmatpush1.msra.mxu0 0.0
        %847 = vmatprep.subr.mxu0 0.0
        %848 = vmatpush1.msra.mxu0 0.0
        %849 = vmatprep.subr.mxu0 0.0
        %850 = vmatpush1.msra.mxu0 0.0
        %851 = vmatprep.subr.mxu0 0.0
        %852 = vmatpush1.msra.mxu0 0.0
        %853 = vmatprep.subr.mxu0 0.0
        %854 = vmatpush1.msra.mxu0 0.0
        %855 = vmatprep.subr.mxu0 0.0
        %856 = vmatpush1.msra.mxu0 0.0
        %857 = vmatprep.subr.mxu0 0.0
        %858 = vmatpush1.msra.mxu0 0.0
        %859 = vmatprep.subr.mxu0 0.0
        %860 = vmatpush1.msra.mxu0 0.0
        %861 = vmatprep.subr.mxu0 0.0
        %862 = vmatpush1.msra.mxu0 0.0
        %863 = vmatprep.subr.mxu0 0.0
        %864 = vmatpush1.msra.mxu0 0.0
        %865 = vmatprep.subr.mxu0 0.0
        %866 = vmatpush1.msra.mxu0 0.0
        %867 = vmatprep.subr.mxu0 0.0
        %868 = vmatpush1.msra.mxu0 0.0
        %869 = vmatprep.subr.mxu0 0.0
        %870 = vmatpush1.msra.mxu0 0.0
        %871 = vmatprep.subr.mxu0 0.0
        %872 = vmatpush1.msra.mxu0 0.0
        %873 = vmatprep.subr.mxu0 0.0
        %874 = vmatpush1.msra.mxu0 0.0
        %875 = vmatprep.subr.mxu0 0.0
        %876 = vmatpush1.msra.mxu0 0.0
        %877 = vmatprep.subr.mxu0 0.0
        %878 = vmatpush1.msra.mxu0 0.0
        %879 = vmatprep.subr.mxu0 0.0
        %880 = vmatpush1.msra.mxu0 0.0
        %881 = vmatprep.subr.mxu0 0.0
        %882 = vmatpush1.msra.mxu0 0.0
        %883 = vmatprep.subr.mxu0 0.0
        %884 = vmatpush1.msra.mxu0 0.0
        %885 = vmatprep.mubr.f32.mxu0 0.0
        %886 = vmatmul.mubr.f32.gmra.mrb[0].mxu0 %v819
        %v887 = vpop.f32.mrb[0].mxu0
        %v888 = vadd.f32 %v815, %v887
        %v889 = vpop.f32.mrb[0].mxu0
        %890 = vdwg.mxu0
        %v891 = vld [vmem:[%s674] sm:$0xff]
        %v892 = vadd.f32 %v888, %v891
        %vm893 = vcmp.ge.f32.partialorder %v892, 0.0
        %v894 = vmul.f32 %v892, 0.1
        %v895 = vsel %vm893, %v892, %v894
        %v897 = vrot.slane %v895, 5
        %vm899 = vcmask 1042432
        %v900 = vsel %vm899, 0.0, %v897
        %v901 = vsel %vm899, %v897, 0.0
        %903 = vrot.lane.b32.xlu0 %v900, 120
        %v904 = vpop.permute.xlu0 %903
        %v907 = vrot.slane %v900, 1
        %v908 = vrot.slane %v901, 1
        %v909 = vsel %vm789, %v907, %v908
        %910 = vrot.lane.b32.xlu0 %v909, 8
        %v911 = vpop.permute.xlu0 %910
        %v913 = vrot.slane %v900, 2
        %v914 = vrot.slane %v901, 2
        %v915 = vsel %vm796, %v913, %v914
        %916 = vrot.lane.b32.xlu0 %v915, 24
        %v917 = vpop.permute.xlu0 %916
        %vm919 = vcmask 1044480
        %v920 = vrot.slane %v900, 3
        %v921 = vrot.slane %v901, 3
        %v922 = vsel %vm919, %v920, %v921
        %923 = vrot.lane.b32.xlu0 %v922, 40
        %v924 = vpop.permute.xlu0 %923
        %vm926 = vcmask 1043456
        %v927 = vrot.slane %v900, 4
        %v928 = vrot.slane %v901, 4
        %v929 = vsel %vm926, %v927, %v928
        %930 = vrot.lane.b32.xlu0 %v929, 56
        %v931 = vpop.permute.xlu0 %930
        %v933 = vrot.slane %v900, 5
        %v934 = vrot.slane %v901, 5
        %v935 = vsel %vm899, %v933, %v934
        %936 = vrot.lane.b32.xlu0 %v935, 72
        %v937 = vpop.permute.xlu0 %936
        %vm939 = vcmask 1041408
        %v940 = vrot.slane %v900, 6
        %v941 = vrot.slane %v901, 6
        %v942 = vsel %vm939, %v940, %v941
        %943 = vrot.lane.b32.xlu0 %v942, 88
        %v944 = vpop.permute.xlu0 %943
        %v946 = vsel %vm803, %v904, %v911
        %v947 = vsel %vm817, %v946, %v917
        %vm948 = vcmask 326656
        %v949 = vsel %vm948, %v947, %v924
        %vm950 = vcmask 457728
        %v951 = vsel %vm950, %v949, %v931
        %vm952 = vcmask 588800
        %v953 = vsel %vm952, %v951, %v937
        %vm954 = vcmask 719872
        %v955 = vsel %vm954, %v953, %v944
        %v956 = vld [vmem:[%s7] sm:$0xff]
        %v957 = vld [vmem:[%s7 + $0x8] sm:$0xff]
        %v958 = vld [vmem:[%s7 + $0x10] sm:$0xff]
        %v959 = vld [vmem:[%s7 + $0x18] sm:$0xff]
        %v960 = vld [vmem:[%s7 + $0x20] sm:$0xff]
        %v961 = vld [vmem:[%s7 + $0x28] sm:$0xff]
        %v962 = vld [vmem:[%s7 + $0x30] sm:$0xff]
        %v963 = vld [vmem:[%s7 + $0x38] sm:$0xff]
        %v964 = vld [vmem:[%s7 + $0x40] sm:$0xff]
        %v965 = vld [vmem:[%s7 + $0x48] sm:$0xff]
        %v966 = vld [vmem:[%s7 + $0x50] sm:$0xff]
        %v967 = vld [vmem:[%s7 + $0x58] sm:$0xff]
        %vm968 = vcmask 785408
        %v970 = vsel %vm968, %v955, 0
        %972 = vmatprep.subr.mxu0 0.0
        %973 = vmatpush1.msra.mxu0 %v956
        %974 = vmatprep.subr.mxu0 0.0
        %975 = vmatpush1.msra.mxu0 %v957
        %976 = vmatprep.subr.mxu0 0.0
        %977 = vmatpush1.msra.mxu0 %v958
        %978 = vmatprep.subr.mxu0 0.0
        %979 = vmatpush1.msra.mxu0 %v959
        %980 = vmatprep.subr.mxu0 0.0
        %981 = vmatpush1.msra.mxu0 %v960
        %982 = vmatprep.subr.mxu0 0.0
        %983 = vmatpush1.msra.mxu0 %v961
        %984 = vmatprep.subr.mxu0 0.0
        %985 = vmatpush1.msra.mxu0 %v962
        %986 = vmatprep.subr.mxu0 0.0
        %987 = vmatpush1.msra.mxu0 %v963
        %988 = vmatprep.subr.mxu0 0.0
        %989 = vmatpush1.msra.mxu0 %v964
        %990 = vmatprep.subr.mxu0 0.0
        %991 = vmatpush1.msra.mxu0 %v965
        %992 = vmatprep.subr.mxu0 0.0
        %993 = vmatpush1.msra.mxu0 %v966
        %994 = vmatprep.subr.mxu0 0.0
        %995 = vmatpush1.msra.mxu0 %v967
        %996 = vmatprep.subr.mxu0 0.0
        %997 = vmatpush1.msra.mxu0 0.0
        %998 = vmatprep.subr.mxu0 0.0
        %999 = vmatpush1.msra.mxu0 0.0
        %1000 = vmatprep.subr.mxu0 0.0
        %1001 = vmatpush1.msra.mxu0 0.0
        %1002 = vmatprep.subr.mxu0 0.0
        %1003 = vmatpush1.msra.mxu0 0.0
        %1004 = vmatprep.subr.mxu0 0.0
        %1005 = vmatpush1.msra.mxu0 0.0
        %1006 = vmatprep.subr.mxu0 0.0
        %1007 = vmatpush1.msra.mxu0 0.0
        %1008 = vmatprep.subr.mxu0 0.0
        %1009 = vmatpush1.msra.mxu0 0.0
        %1010 = vmatprep.subr.mxu0 0.0
        %1011 = vmatpush1.msra.mxu0 0.0
        %1012 = vmatprep.subr.mxu0 0.0
        %1013 = vmatpush1.msra.mxu0 0.0
        %1014 = vmatprep.subr.mxu0 0.0
        %1015 = vmatpush1.msra.mxu0 0.0
        %1016 = vmatprep.subr.mxu0 0.0
        %1017 = vmatpush1.msra.mxu0 0.0
        %1018 = vmatprep.subr.mxu0 0.0
        %1019 = vmatpush1.msra.mxu0 0.0
        %1020 = vmatprep.subr.mxu0 0.0
        %1021 = vmatpush1.msra.mxu0 0.0
        %1022 = vmatprep.subr.mxu0 0.0
        %1023 = vmatpush1.msra.mxu0 0.0
        %1024 = vmatprep.subr.mxu0 0.0
        %1025 = vmatpush1.msra.mxu0 0.0
        %1026 = vmatprep.subr.mxu0 0.0
        %1027 = vmatpush1.msra.mxu0 0.0
        %1028 = vmatprep.subr.mxu0 0.0
        %1029 = vmatpush1.msra.mxu0 0.0
        %1030 = vmatprep.subr.mxu0 0.0
        %1031 = vmatpush1.msra.mxu0 0.0
        %1032 = vmatprep.subr.mxu0 0.0
        %1033 = vmatpush1.msra.mxu0 0.0
        %1034 = vmatprep.subr.mxu0 0.0
        %1035 = vmatpush1.msra.mxu0 0.0
        %1036 = vmatprep.mubr.f32.mxu0 0.0
        %1037 = vmatmul.mubr.f32.gmra.mrb[0].mxu0 %v970
        %v1038 = vpop.f32.mrb[0].mxu0
        %v1039 = vadd.f32 0.0, %v1038
        %v1040 = vpop.f32.mrb[0].mxu0
        %1041 = vdwg.mxu0
        %v1042 = vadd.f32 %v892, %v1039
        %v1043 = vld [vmem:[%s8] sm:$0x1]
        %v1045 = vlaneseq
        %v1046 = vshrl.u32 %v1045, 7
        %v1047 = vsub.s32 0, %v1046
        %v1048 = vrot.slane %v1043, %v1047
        %v1050 = vadd.f32 %v1042, %v1048
        %vm1051 = vcmp.ge.f32.partialorder %v1050, 0.0
        %v1052 = vmul.f32 %v1050, 0.1
        %v1053 = vsel %vm1051, %v1050, %v1052
        %v1055 = vrot.slane %v1053, 7
        %v1057 = vsel %vm784, 0.0, %v1055
        %v1058 = vsel %vm784, %v1055, 0.0
        %1060 = vrot.lane.b32.xlu0 %v1057, 120
        %v1061 = vpop.permute.xlu0 %1060
        %v1064 = vrot.slane %v1057, 1
        %v1065 = vrot.slane %v1058, 1
        %v1066 = vsel %vm789, %v1064, %v1065
        %1067 = vrot.lane.b32.xlu0 %v1066, 8
        %v1068 = vpop.permute.xlu0 %1067
        %v1070 = vrot.slane %v1057, 2
        %v1071 = vrot.slane %v1058, 2
        %v1072 = vsel %vm796, %v1070, %v1071
        %1073 = vrot.lane.b32.xlu0 %v1072, 24
        %v1074 = vpop.permute.xlu0 %1073
        %v1076 = vsel %vm803, %v1061, %v1068
        %v1077 = vsel %vm817, %v1076, %v1074
        %v1078 = vld [vmem:[%s9] sm:$0xff]
        %v1079 = vld [vmem:[%s9 + $0x8] sm:$0xff]
        %v1080 = vld [vmem:[%s9 + $0x10] sm:$0xff]
        %v1081 = vld [vmem:[%s9 + $0x18] sm:$0xff]
        %v1082 = vld [vmem:[%s10] sm:$0x1]
        %v1084 = vlaneseq
        %v1085 = vshrl.u32 %v1084, 7
        %v1086 = vsub.s32 0, %v1085
        %v1087 = vrot.slane %v1082, %v1086
        %vm1089 = vcmask 261120
        %v1091 = vsel %vm1089, %v1077, 0
        %1093 = vmatprep.subr.mxu0 0.0
        %1094 = vmatpush1.msra.mxu0 %v1078
        %1095 = vmatprep.subr.mxu0 0.0
        %1096 = vmatpush1.msra.mxu0 %v1079
        %1097 = vmatprep.subr.mxu0 0.0
        %1098 = vmatpush1.msra.mxu0 %v1080
        %1099 = vmatprep.subr.mxu0 0.0
        %1100 = vmatpush1.msra.mxu0 %v1081
        %1101 = vmatprep.subr.mxu0 0.0
        %1102 = vmatpush1.msra.mxu0 0.0
        %1103 = vmatprep.subr.mxu0 0.0
        %1104 = vmatpush1.msra.mxu0 0.0
        %1105 = vmatprep.subr.mxu0 0.0
        %1106 = vmatpush1.msra.mxu0 0.0
        %1107 = vmatprep.subr.mxu0 0.0
        %1108 = vmatpush1.msra.mxu0 0.0
        %1109 = vmatprep.subr.mxu0 0.0
        %1110 = vmatpush1.msra.mxu0 0.0
        %1111 = vmatprep.subr.mxu0 0.0
        %1112 = vmatpush1.msra.mxu0 0.0
        %1113 = vmatprep.subr.mxu0 0.0
        %1114 = vmatpush1.msra.mxu0 0.0
        %1115 = vmatprep.subr.mxu0 0.0
        %1116 = vmatpush1.msra.mxu0 0.0
        %1117 = vmatprep.subr.mxu0 0.0
        %1118 = vmatpush1.msra.mxu0 0.0
        %1119 = vmatprep.subr.mxu0 0.0
        %1120 = vmatpush1.msra.mxu0 0.0
        %1121 = vmatprep.subr.mxu0 0.0
        %1122 = vmatpush1.msra.mxu0 0.0
        %1123 = vmatprep.subr.mxu0 0.0
        %1124 = vmatpush1.msra.mxu0 0.0
        %1125 = vmatprep.subr.mxu0 0.0
        %1126 = vmatpush1.msra.mxu0 0.0
        %1127 = vmatprep.subr.mxu0 0.0
        %1128 = vmatpush1.msra.mxu0 0.0
        %1129 = vmatprep.subr.mxu0 0.0
        %1130 = vmatpush1.msra.mxu0 0.0
        %1131 = vmatprep.subr.mxu0 0.0
        %1132 = vmatpush1.msra.mxu0 0.0
        %1133 = vmatprep.subr.mxu0 0.0
        %1134 = vmatpush1.msra.mxu0 0.0
        %1135 = vmatprep.subr.mxu0 0.0
        %1136 = vmatpush1.msra.mxu0 0.0
        %1137 = vmatprep.subr.mxu0 0.0
        %1138 = vmatpush1.msra.mxu0 0.0
        %1139 = vmatprep.subr.mxu0 0.0
        %1140 = vmatpush1.msra.mxu0 0.0
        %1141 = vmatprep.subr.mxu0 0.0
        %1142 = vmatpush1.msra.mxu0 0.0
        %1143 = vmatprep.subr.mxu0 0.0
        %1144 = vmatpush1.msra.mxu0 0.0
        %1145 = vmatprep.subr.mxu0 0.0
        %1146 = vmatpush1.msra.mxu0 0.0
        %1147 = vmatprep.subr.mxu0 0.0
        %1148 = vmatpush1.msra.mxu0 0.0
        %1149 = vmatprep.subr.mxu0 0.0
        %1150 = vmatpush1.msra.mxu0 0.0
        %1151 = vmatprep.subr.mxu0 0.0
        %1152 = vmatpush1.msra.mxu0 0.0
        %1153 = vmatprep.subr.mxu0 0.0
        %1154 = vmatpush1.msra.mxu0 0.0
        %1155 = vmatprep.subr.mxu0 0.0
        %1156 = vmatpush1.msra.mxu0 0.0
        %1157 = vmatprep.mubr.f32.mxu0 0.0
        %1158 = vmatmul.mubr.f32.gmra.mrb[0].mxu0 %v1091
        %v1159 = vpop.f32.mrb[0].mxu0
        %v1160 = vadd.f32 %v1087, %v1159
        %v1161 = vpop.f32.mrb[0].mxu0
        %1162 = vdwg.mxu0
        %v1163 = vld [vmem:[%s683] sm:$0xff]
        %v1164 = vadd.f32 %v1160, %v1163
        %vm1165 = vcmp.ge.f32.partialorder %v1164, 0.0
        %v1166 = vmul.f32 %v1164, 0.1
        %v1167 = vsel %vm1165, %v1164, %v1166
        %v1169 = vrot.slane %v1167, 6
        %v1171 = vsel %vm939, 0.0, %v1169
        %v1172 = vsel %vm939, %v1169, 0.0
        %1174 = vrot.lane.b32.xlu0 %v1171, 104
        %v1175 = vpop.permute.xlu0 %1174
        %v1178 = vrot.slane %v1171, 1
        %v1179 = vrot.slane %v1172, 1
        %v1180 = vsel %vm789, %v1178, %v1179
        %1181 = vrot.lane.b32.xlu0 %v1180, 8
        %v1182 = vpop.permute.xlu0 %1181
        %v1184 = vrot.slane %v1171, 2
        %v1185 = vrot.slane %v1172, 2
        %v1186 = vsel %vm796, %v1184, %v1185
        %1187 = vrot.lane.b32.xlu0 %v1186, 40
        %v1188 = vpop.permute.xlu0 %1187
        %v1190 = vrot.slane %v1171, 3
        %v1191 = vrot.slane %v1172, 3
        %v1192 = vsel %vm919, %v1190, %v1191
        %1193 = vrot.lane.b32.xlu0 %v1192, 72
        %v1194 = vpop.permute.xlu0 %1193
        %v1196 = vrot.slane %v1171, 4
        %v1197 = vrot.slane %v1172, 4
        %v1198 = vsel %vm926, %v1196, %v1197
        %1199 = vrot.lane.b32.xlu0 %v1198, 104
        %v1200 = vpop.permute.xlu0 %1199
        %v1202 = vsel %vm803, %v1175, %v1182
        %v1203 = vsel %vm948, %v1202, %v1188
        %v1204 = vsel %vm952, %v1203, %v1194
        %vm1205 = vcmask 850944
        %v1206 = vsel %vm1205, %v1204, %v1200
        %v1207 = vld [vmem:[%s11] sm:$0xff]
        %v1208 = vld [vmem:[%s11 + $0x8] sm:$0xff]
        %v1209 = vld [vmem:[%s11 + $0x10] sm:$0xff]
        %v1210 = vld [vmem:[%s11 + $0x18] sm:$0xff]
        %v1211 = vld [vmem:[%s11 + $0x20] sm:$0xff]
        %v1212 = vld [vmem:[%s11 + $0x28] sm:$0xff]
        %v1213 = vld [vmem:[%s11 + $0x30] sm:$0xff]
        %v1214 = vld [vmem:[%s11 + $0x38] sm:$0xff]
        %v1215 = vld [vmem:[%s11 + $0x40] sm:$0xff]
        %v1216 = vld [vmem:[%s11 + $0x48] sm:$0xff]
        %v1217 = vld [vmem:[%s11 + $0x50] sm:$0xff]
        %v1218 = vld [vmem:[%s11 + $0x58] sm:$0xff]
        %v1219 = vld [vmem:[%s11 + $0x60] sm:$0xff]
        %v1220 = vld [vmem:[%s11 + $0x68] sm:$0xff]
        %vm1221 = vcmask 916480
        %v1223 = vsel %vm1221, %v1206, 0
        %1225 = vmatprep.subr.mxu0 0.0
        %1226 = vmatpush1.msra.mxu0 %v1207
        %1227 = vmatprep.subr.mxu0 0.0
        %1228 = vmatpush1.msra.mxu0 %v1208
        %1229 = vmatprep.subr.mxu0 0.0
        %1230 = vmatpush1.msra.mxu0 %v1209
        %1231 = vmatprep.subr.mxu0 0.0
        %1232 = vmatpush1.msra.mxu0 %v1210
        %1233 = vmatprep.subr.mxu0 0.0
        %1234 = vmatpush1.msra.mxu0 %v1211
        %1235 = vmatprep.subr.mxu0 0.0
        %1236 = vmatpush1.msra.mxu0 %v1212
        %1237 = vmatprep.subr.mxu0 0.0
        %1238 = vmatpush1.msra.mxu0 %v1213
        %1239 = vmatprep.subr.mxu0 0.0
        %1240 = vmatpush1.msra.mxu0 %v1214
        %1241 = vmatprep.subr.mxu0 0.0
        %1242 = vmatpush1.msra.mxu0 %v1215
        %1243 = vmatprep.subr.mxu0 0.0
        %1244 = vmatpush1.msra.mxu0 %v1216
        %1245 = vmatprep.subr.mxu0 0.0
        %1246 = vmatpush1.msra.mxu0 %v1217
        %1247 = vmatprep.subr.mxu0 0.0
        %1248 = vmatpush1.msra.mxu0 %v1218
        %1249 = vmatprep.subr.mxu0 0.0
        %1250 = vmatpush1.msra.mxu0 %v1219
        %1251 = vmatprep.subr.mxu0 0.0
        %1252 = vmatpush1.msra.mxu0 %v1220
        %1253 = vmatprep.subr.mxu0 0.0
        %1254 = vmatpush1.msra.mxu0 0.0
        %1255 = vmatprep.subr.mxu0 0.0
        %1256 = vmatpush1.msra.mxu0 0.0
        %1257 = vmatprep.subr.mxu0 0.0
        %1258 = vmatpush1.msra.mxu0 0.0
        %1259 = vmatprep.subr.mxu0 0.0
        %1260 = vmatpush1.msra.mxu0 0.0
        %1261 = vmatprep.subr.mxu0 0.0
        %1262 = vmatpush1.msra.mxu0 0.0
        %1263 = vmatprep.subr.mxu0 0.0
        %1264 = vmatpush1.msra.mxu0 0.0
        %1265 = vmatprep.subr.mxu0 0.0
        %1266 = vmatpush1.msra.mxu0 0.0
        %1267 = vmatprep.subr.mxu0 0.0
        %1268 = vmatpush1.msra.mxu0 0.0
        %1269 = vmatprep.subr.mxu0 0.0
        %1270 = vmatpush1.msra.mxu0 0.0
        %1271 = vmatprep.subr.mxu0 0.0
        %1272 = vmatpush1.msra.mxu0 0.0
        %1273 = vmatprep.subr.mxu0 0.0
        %1274 = vmatpush1.msra.mxu0 0.0
        %1275 = vmatprep.subr.mxu0 0.0
        %1276 = vmatpush1.msra.mxu0 0.0
        %1277 = vmatprep.subr.mxu0 0.0
        %1278 = vmatpush1.msra.mxu0 0.0
        %1279 = vmatprep.subr.mxu0 0.0
        %1280 = vmatpush1.msra.mxu0 0.0
        %1281 = vmatprep.subr.mxu0 0.0
        %1282 = vmatpush1.msra.mxu0 0.0
        %1283 = vmatprep.subr.mxu0 0.0
        %1284 = vmatpush1.msra.mxu0 0.0
        %1285 = vmatprep.subr.mxu0 0.0
        %1286 = vmatpush1.msra.mxu0 0.0
        %1287 = vmatprep.subr.mxu0 0.0
        %1288 = vmatpush1.msra.mxu0 0.0
        %1289 = vmatprep.mubr.f32.mxu0 0.0
        %1290 = vmatmul.mubr.f32.gmra.mrb[0].mxu0 %v1223
        %v1291 = vpop.f32.mrb[0].mxu0
        %v1292 = vadd.f32 0.0, %v1291
        %v1293 = vpop.f32.mrb[0].mxu0
        %1294 = vdwg.mxu0
        %v1295 = vadd.f32 %v1164, %v1292
        %v1296 = vld [vmem:[%s12] sm:$0x1]
        %v1298 = vlaneseq
        %v1299 = vshrl.u32 %v1298, 7
        %v1300 = vsub.s32 0, %v1299
        %v1301 = vrot.slane %v1296, %v1300
        %v1303 = vadd.f32 %v1295, %v1301
        %vm1304 = vcmp.ge.f32.partialorder %v1303, 0.0
        %v1305 = vmul.f32 %v1303, 0.1
        %v1306 = vsel %vm1304, %v1303, %v1305
        %v1308 = vrot.slane %v1306, 7
        %v1310 = vsel %vm784, 0.0, %v1308
        %v1311 = vsel %vm784, %v1308, 0.0
        %1313 = vrot.lane.b32.xlu0 %v1310, 104
        %v1314 = vpop.permute.xlu0 %1313
        %v1317 = vrot.slane %v1310, 1
        %v1318 = vrot.slane %v1311, 1
        %v1319 = vsel %vm789, %v1317, %v1318
        %1320 = vrot.lane.b32.xlu0 %v1319, 8
        %v1321 = vpop.permute.xlu0 %1320
        %v1323 = vrot.slane %v1310, 2
        %v1324 = vrot.slane %v1311, 2
        %v1325 = vsel %vm796, %v1323, %v1324
        %1326 = vrot.lane.b32.xlu0 %v1325, 40
        %v1327 = vpop.permute.xlu0 %1326
        %v1329 = vsel %vm803, %v1314, %v1321
        %v1330 = vsel %vm948, %v1329, %v1327
        %v1331 = vld [vmem:[%s13] sm:$0xff]
        %v1332 = vld [vmem:[%s13 + $0x8] sm:$0xff]
        %v1333 = vld [vmem:[%s13 + $0x10] sm:$0xff]
        %v1334 = vld [vmem:[%s13 + $0x18] sm:$0xff]
        %v1335 = vld [vmem:[%s13 + $0x20] sm:$0xff]
        %v1336 = vld [vmem:[%s13 + $0x28] sm:$0xff]
        %v1337 = vld [vmem:[%s14] sm:$0x1]
        %v1339 = vlaneseq
        %v1340 = vshrl.u32 %v1339, 7
        %v1341 = vsub.s32 0, %v1340
        %v1342 = vrot.slane %v1337, %v1341
        %vm1344 = vcmask 392192
        %v1346 = vsel %vm1344, %v1330, 0
        %1348 = vmatprep.subr.mxu0 0.0
        %1349 = vmatpush1.msra.mxu0 %v1331
        %1350 = vmatprep.subr.mxu0 0.0
        %1351 = vmatpush1.msra.mxu0 %v1332
        %1352 = vmatprep.subr.mxu0 0.0
        %1353 = vmatpush1.msra.mxu0 %v1333
        %1354 = vmatprep.subr.mxu0 0.0
        %1355 = vmatpush1.msra.mxu0 %v1334
        %1356 = vmatprep.subr.mxu0 0.0
        %1357 = vmatpush1.msra.mxu0 %v1335
        %1358 = vmatprep.subr.mxu0 0.0
        %1359 = vmatpush1.msra.mxu0 %v1336
        %1360 = vmatprep.subr.mxu0 0.0
        %1361 = vmatpush1.msra.mxu0 0.0
        %1362 = vmatprep.subr.mxu0 0.0
        %1363 = vmatpush1.msra.mxu0 0.0
        %1364 = vmatprep.subr.mxu0 0.0
        %1365 = vmatpush1.msra.mxu0 0.0
        %1366 = vmatprep.subr.mxu0 0.0
        %1367 = vmatpush1.msra.mxu0 0.0
        %1368 = vmatprep.subr.mxu0 0.0
        %1369 = vmatpush1.msra.mxu0 0.0
        %1370 = vmatprep.subr.mxu0 0.0
        %1371 = vmatpush1.msra.mxu0 0.0
        %1372 = vmatprep.subr.mxu0 0.0
        %1373 = vmatpush1.msra.mxu0 0.0
        %1374 = vmatprep.subr.mxu0 0.0
        %1375 = vmatpush1.msra.mxu0 0.0
        %1376 = vmatprep.subr.mxu0 0.0
        %1377 = vmatpush1.msra.mxu0 0.0
        %1378 = vmatprep.subr.mxu0 0.0
        %1379 = vmatpush1.msra.mxu0 0.0
        %1380 = vmatprep.subr.mxu0 0.0
        %1381 = vmatpush1.msra.mxu0 0.0
        %1382 = vmatprep.subr.mxu0 0.0
        %1383 = vmatpush1.msra.mxu0 0.0
        %1384 = vmatprep.subr.mxu0 0.0
        %1385 = vmatpush1.msra.mxu0 0.0
        %1386 = vmatprep.subr.mxu0 0.0
        %1387 = vmatpush1.msra.mxu0 0.0
        %1388 = vmatprep.subr.mxu0 0.0
        %1389 = vmatpush1.msra.mxu0 0.0
        %1390 = vmatprep.subr.mxu0 0.0
        %1391 = vmatpush1.msra.mxu0 0.0
        %1392 = vmatprep.subr.mxu0 0.0
        %1393 = vmatpush1.msra.mxu0 0.0
        %1394 = vmatprep.subr.mxu0 0.0
        %1395 = vmatpush1.msra.mxu0 0.0
        %1396 = vmatprep.subr.mxu0 0.0
        %1397 = vmatpush1.msra.mxu0 0.0
        %1398 = vmatprep.subr.mxu0 0.0
        %1399 = vmatpush1.msra.mxu0 0.0
        %1400 = vmatprep.subr.mxu0 0.0
        %1401 = vmatpush1.msra.mxu0 0.0
        %1402 = vmatprep.subr.mxu0 0.0
        %1403 = vmatpush1.msra.mxu0 0.0
        %1404 = vmatprep.subr.mxu0 0.0
        %1405 = vmatpush1.msra.mxu0 0.0
        %1406 = vmatprep.subr.mxu0 0.0
        %1407 = vmatpush1.msra.mxu0 0.0
        %1408 = vmatprep.subr.mxu0 0.0
        %1409 = vmatpush1.msra.mxu0 0.0
        %1410 = vmatprep.subr.mxu0 0.0
        %1411 = vmatpush1.msra.mxu0 0.0
        %1412 = vmatprep.mubr.f32.mxu0 0.0
        %1413 = vmatmul.mubr.f32.gmra.mrb[0].mxu0 %v1346
        %v1414 = vpop.f32.mrb[0].mxu0
        %v1415 = vadd.f32 %v1342, %v1414
        %v1416 = vpop.f32.mrb[0].mxu0
        %1417 = vdwg.mxu0
        %v1418 = vld [vmem:[%s692] sm:$0xff]
        %v1419 = vadd.f32 %v1415, %v1418
        %vm1420 = vcmp.ge.f32.partialorder %v1419, 0.0
        %v1421 = vmul.f32 %v1419, 0.1
        %v1422 = vsel %vm1420, %v1419, %v1421
        %v1424 = vrot.slane %v1422, 7
        %v1426 = vsel %vm784, 0.0, %v1424
        %v1427 = vsel %vm784, %v1424, 0.0
        %1429 = vrot.lane.b32.xlu0 %v1426, 104
        %v1430 = vpop.permute.xlu0 %1429
        %v1433 = vrot.slane %v1426, 1
        %v1434 = vrot.slane %v1427, 1
        %v1435 = vsel %vm789, %v1433, %v1434
        %1436 = vrot.lane.b32.xlu0 %v1435, 40
        %v1437 = vpop.permute.xlu0 %1436
        %v1439 = vrot.slane %v1426, 2
        %v1440 = vrot.slane %v1427, 2
        %v1441 = vsel %vm796, %v1439, %v1440
        %1442 = vrot.lane.b32.xlu0 %v1441, 104
        %v1443 = vpop.permute.xlu0 %1442
        %v1445 = vsel %vm948, %v1430, %v1437
        %v1446 = vsel %vm1205, %v1445, %v1443
        %v1447 = vld [vmem:[%s15] sm:$0xff]
        %v1448 = vld [vmem:[%s15 + $0x8] sm:$0xff]
        %v1449 = vld [vmem:[%s15 + $0x10] sm:$0xff]
        %v1450 = vld [vmem:[%s15 + $0x18] sm:$0xff]
        %v1451 = vld [vmem:[%s15 + $0x20] sm:$0xff]
        %v1452 = vld [vmem:[%s15 + $0x28] sm:$0xff]
        %v1453 = vld [vmem:[%s15 + $0x30] sm:$0xff]
        %v1454 = vld [vmem:[%s15 + $0x38] sm:$0xff]
        %v1455 = vld [vmem:[%s15 + $0x40] sm:$0xff]
        %v1456 = vld [vmem:[%s15 + $0x48] sm:$0xff]
        %v1457 = vld [vmem:[%s15 + $0x50] sm:$0xff]
        %v1458 = vld [vmem:[%s15 + $0x58] sm:$0xff]
        %v1459 = vld [vmem:[%s15 + $0x60] sm:$0xff]
        %v1460 = vld [vmem:[%s15 + $0x68] sm:$0xff]
        %v1461 = vld [vmem:[%s15 + $0x70] sm:$0xff]
        %v1462 = vld [vmem:[%s15 + $0x78] sm:$0xff]
        %v1463 = vld [vmem:[%s15 + $0x80] sm:$0xff]
        %v1464 = vld [vmem:[%s15 + $0x88] sm:$0xff]
        %v1465 = vsel %vm805, %v1443, 0
        %1467 = vmatprep.subr.mxu0 0.0
        %1468 = vmatpush1.msra.mxu0 %v1447
        %1469 = vmatprep.subr.mxu0 0.0
        %1470 = vmatpush1.msra.mxu0 %v1448
        %1471 = vmatprep.subr.mxu0 0.0
        %1472 = vmatpush1.msra.mxu0 %v1449
        %1473 = vmatprep.subr.mxu0 0.0
        %1474 = vmatpush1.msra.mxu0 %v1450
        %1475 = vmatprep.subr.mxu0 0.0
        %1476 = vmatpush1.msra.mxu0 %v1451
        %1477 = vmatprep.subr.mxu0 0.0
        %1478 = vmatpush1.msra.mxu0 %v1452
        %1479 = vmatprep.subr.mxu0 0.0
        %1480 = vmatpush1.msra.mxu0 %v1453
        %1481 = vmatprep.subr.mxu0 0.0
        %1482 = vmatpush1.msra.mxu0 %v1454
        %1483 = vmatprep.subr.mxu0 0.0
        %1484 = vmatpush1.msra.mxu0 %v1455
        %1485 = vmatprep.subr.mxu0 0.0
        %1486 = vmatpush1.msra.mxu0 %v1456
        %1487 = vmatprep.subr.mxu0 0.0
        %1488 = vmatpush1.msra.mxu0 %v1457
        %1489 = vmatprep.subr.mxu0 0.0
        %1490 = vmatpush1.msra.mxu0 %v1458
        %1491 = vmatprep.subr.mxu0 0.0
        %1492 = vmatpush1.msra.mxu0 %v1459
        %1493 = vmatprep.subr.mxu0 0.0
        %1494 = vmatpush1.msra.mxu0 %v1460
        %1495 = vmatprep.subr.mxu0 0.0
        %1496 = vmatpush1.msra.mxu0 %v1461
        %1497 = vmatprep.subr.mxu0 0.0
        %1498 = vmatpush1.msra.mxu0 %v1462
        %1499 = vmatprep.subr.mxu0 0.0
        %1500 = vmatpush1.msra.mxu0 %v1463
        %1501 = vmatprep.subr.mxu0 0.0
        %1502 = vmatpush1.msra.mxu0 %v1464
        %1503 = vmatprep.subr.mxu0 0.0
        %1504 = vmatpush1.msra.mxu0 0.0
        %1505 = vmatprep.subr.mxu0 0.0
        %1506 = vmatpush1.msra.mxu0 0.0
        %1507 = vmatprep.subr.mxu0 0.0
        %1508 = vmatpush1.msra.mxu0 0.0
        %1509 = vmatprep.subr.mxu0 0.0
        %1510 = vmatpush1.msra.mxu0 0.0
        %1511 = vmatprep.subr.mxu0 0.0
        %1512 = vmatpush1.msra.mxu0 0.0
        %1513 = vmatprep.subr.mxu0 0.0
        %1514 = vmatpush1.msra.mxu0 0.0
        %1515 = vmatprep.subr.mxu0 0.0
        %1516 = vmatpush1.msra.mxu0 0.0
        %1517 = vmatprep.subr.mxu0 0.0
        %1518 = vmatpush1.msra.mxu0 0.0
        %1519 = vmatprep.subr.mxu0 0.0
        %1520 = vmatpush1.msra.mxu0 0.0
        %1521 = vmatprep.subr.mxu0 0.0
        %1522 = vmatpush1.msra.mxu0 0.0
        %1523 = vmatprep.subr.mxu0 0.0
        %1524 = vmatpush1.msra.mxu0 0.0
        %1525 = vmatprep.subr.mxu0 0.0
        %1526 = vmatpush1.msra.mxu0 0.0
        %1527 = vmatprep.subr.mxu0 0.0
        %1528 = vmatpush1.msra.mxu0 0.0
        %1529 = vmatprep.subr.mxu0 0.0
        %1530 = vmatpush1.msra.mxu0 0.0
        %1531 = vmatprep.mubr.f32.mxu0 %v1465
        %1532 = vmatmul.mubr.f32.gmra.mrb[0].mxu0 %v1446
        %v1533 = vpop.f32.mrb[0].mxu0
        %v1534 = vadd.f32 0.0, %v1533
        %v1535 = vpop.f32.mrb[0].mxu0
        %1536 = vdwg.mxu0
        %v1537 = vadd.f32 %v1419, %v1534
        %v1538 = vld [vmem:[%s16] sm:$0x1]
        %v1540 = vlaneseq
        %v1541 = vshrl.u32 %v1540, 7
        %v1542 = vsub.s32 0, %v1541
        %v1543 = vrot.slane %v1538, %v1542
        %v1545 = vadd.f32 %v1537, %v1543
        %vm1546 = vcmp.ge.f32.partialorder %v1545, 0.0
        %v1547 = vmul.f32 %v1545, 0.1
        %v1548 = vsel %vm1546, %v1545, %v1547
        %v1550 = vrot.slane %v1548, 7
        %v1552 = vsel %vm784, 0.0, %v1550
        %v1553 = vsel %vm784, %v1550, 0.0
        %1555 = vrot.lane.b32.xlu0 %v1552, 72
        %v1556 = vpop.permute.xlu0 %1555
        %v1559 = vrot.slane %v1552, 1
        %v1560 = vrot.slane %v1553, 1
        %v1561 = vsel %vm789, %v1559, %v1560
        %1562 = vrot.lane.b32.xlu0 %v1561, 8
        %v1563 = vpop.permute.xlu0 %1562
        %v1565 = vrot.slane %v1552, 2
        %v1566 = vrot.slane %v1553, 2
        %v1567 = vsel %vm796, %v1565, %v1566
        %1568 = vrot.lane.b32.xlu0 %v1567, 72
        %v1569 = vpop.permute.xlu0 %1568
        %v1571 = vsel %vm803, %v1556, %v1563
        %v1572 = vsel %vm952, %v1571, %v1569
        %v1573 = vld [vmem:[%s17] sm:$0xff]
        %v1574 = vld [vmem:[%s17 + $0x8] sm:$0xff]
        %v1575 = vld [vmem:[%s17 + $0x10] sm:$0xff]
        %v1576 = vld [vmem:[%s17 + $0x18] sm:$0xff]
        %v1577 = vld [vmem:[%s17 + $0x20] sm:$0xff]
        %v1578 = vld [vmem:[%s17 + $0x28] sm:$0xff]
        %v1579 = vld [vmem:[%s17 + $0x30] sm:$0xff]
        %v1580 = vld [vmem:[%s17 + $0x38] sm:$0xff]
        %v1581 = vld [vmem:[%s17 + $0x40] sm:$0xff]
        %v1582 = vld [vmem:[%s17 + $0x48] sm:$0xff]
        %v1583 = vld [vmem:[%s18] sm:$0x1]
        %v1585 = vlaneseq
        %v1586 = vshrl.u32 %v1585, 7
        %v1587 = vsub.s32 0, %v1586
        %v1588 = vrot.slane %v1583, %v1587
        %vm1590 = vcmask 654336
        %v1592 = vsel %vm1590, %v1572, 0
        %1594 = vmatprep.subr.mxu0 0.0
        %1595 = vmatpush1.msra.mxu0 %v1573
        %1596 = vmatprep.subr.mxu0 0.0
        %1597 = vmatpush1.msra.mxu0 %v1574
        %1598 = vmatprep.subr.mxu0 0.0
        %1599 = vmatpush1.msra.mxu0 %v1575
        %1600 = vmatprep.subr.mxu0 0.0
        %1601 = vmatpush1.msra.mxu0 %v1576
        %1602 = vmatprep.subr.mxu0 0.0
        %1603 = vmatpush1.msra.mxu0 %v1577
        %1604 = vmatprep.subr.mxu0 0.0
        %1605 = vmatpush1.msra.mxu0 %v1578
        %1606 = vmatprep.subr.mxu0 0.0
        %1607 = vmatpush1.msra.mxu0 %v1579
        %1608 = vmatprep.subr.mxu0 0.0
        %1609 = vmatpush1.msra.mxu0 %v1580
        %1610 = vmatprep.subr.mxu0 0.0
        %1611 = vmatpush1.msra.mxu0 %v1581
        %1612 = vmatprep.subr.mxu0 0.0
        %1613 = vmatpush1.msra.mxu0 %v1582
        %1614 = vmatprep.subr.mxu0 0.0
        %1615 = vmatpush1.msra.mxu0 0.0
        %1616 = vmatprep.subr.mxu0 0.0
        %1617 = vmatpush1.msra.mxu0 0.0
        %1618 = vmatprep.subr.mxu0 0.0
        %1619 = vmatpush1.msra.mxu0 0.0
        %1620 = vmatprep.subr.mxu0 0.0
        %1621 = vmatpush1.msra.mxu0 0.0
        %1622 = vmatprep.subr.mxu0 0.0
        %1623 = vmatpush1.msra.mxu0 0.0
        %1624 = vmatprep.subr.mxu0 0.0
        %1625 = vmatpush1.msra.mxu0 0.0
        %1626 = vmatprep.subr.mxu0 0.0
        %1627 = vmatpush1.msra.mxu0 0.0
        %1628 = vmatprep.subr.mxu0 0.0
        %1629 = vmatpush1.msra.mxu0 0.0
        %1630 = vmatprep.subr.mxu0 0.0
        %1631 = vmatpush1.msra.mxu0 0.0
        %1632 = vmatprep.subr.mxu0 0.0
        %1633 = vmatpush1.msra.mxu0 0.0
        %1634 = vmatprep.subr.mxu0 0.0
        %1635 = vmatpush1.msra.mxu0 0.0
        %1636 = vmatprep.subr.mxu0 0.0
        %1637 = vmatpush1.msra.mxu0 0.0
        %1638 = vmatprep.subr.mxu0 0.0
        %1639 = vmatpush1.msra.mxu0 0.0
        %1640 = vmatprep.subr.mxu0 0.0
        %1641 = vmatpush1.msra.mxu0 0.0
        %1642 = vmatprep.subr.mxu0 0.0
        %1643 = vmatpush1.msra.mxu0 0.0
        %1644 = vmatprep.subr.mxu0 0.0
        %1645 = vmatpush1.msra.mxu0 0.0
        %1646 = vmatprep.subr.mxu0 0.0
        %1647 = vmatpush1.msra.mxu0 0.0
        %1648 = vmatprep.subr.mxu0 0.0
        %1649 = vmatpush1.msra.mxu0 0.0
        %1650 = vmatprep.subr.mxu0 0.0
        %1651 = vmatpush1.msra.mxu0 0.0
        %1652 = vmatprep.subr.mxu0 0.0
        %1653 = vmatpush1.msra.mxu0 0.0
        %1654 = vmatprep.subr.mxu0 0.0
        %1655 = vmatpush1.msra.mxu0 0.0
        %1656 = vmatprep.subr.mxu0 0.0
        %1657 = vmatpush1.msra.mxu0 0.0
        %1658 = vmatprep.mubr.f32.mxu0 0.0
        %1659 = vmatmul.mubr.f32.gmra.mrb[0].mxu0 %v1592
        %v1660 = vpop.f32.mrb[0].mxu0
        %v1661 = vadd.f32 %v1588, %v1660
        %v1662 = vpop.f32.mrb[0].mxu0
        %1663 = vdwg.mxu0
        %v1664 = vld [vmem:[%s776] sm:$0xff]
        %v1665 = vadd.f32 %v1661, %v1664
        %vm1666 = vcmp.ge.f32.partialorder %v1665, 0.0
        %v1667 = vmul.f32 %v1665, 0.1
        %v1668 = vsel %vm1666, %v1665, %v1667
        %v1670 = vrot.slane %v1668, 7
        %v1672 = vsel %vm784, 0.0, %v1670
        %v1673 = vsel %vm784, %v1670, 0.0
        %1675 = vrot.lane.b32.xlu0 %v1672, 40
        %v1676 = vpop.permute.xlu0 %1675
        %v1679 = vrot.slane %v1672, 1
        %v1680 = vrot.slane %v1673, 1
        %v1681 = vsel %vm789, %v1679, %v1680
        %1682 = vrot.lane.b32.xlu0 %v1681, 40
        %v1683 = vpop.permute.xlu0 %1682
        %v1685 = vrot.slane %v1672, 2
        %v1686 = vrot.slane %v1673, 2
        %v1687 = vsel %vm796, %v1685, %v1686
        %1688 = vrot.lane.b32.xlu0 %v1687, 40
        %v1689 = vpop.permute.xlu0 %1688
        %v1691 = vsel %vm948, %v1676, %v1683
        %v1692 = vsel %vm948, %v1683, %v1689
        %v1693 = vld [vmem:[%s19] sm:$0xff]
        %v1694 = vld [vmem:[%s19 + $0x8] sm:$0xff]
        %v1695 = vld [vmem:[%s19 + $0x10] sm:$0xff]
        %v1696 = vld [vmem:[%s19 + $0x18] sm:$0xff]
        %v1697 = vld [vmem:[%s19 + $0x20] sm:$0xff]
        %v1698 = vld [vmem:[%s19 + $0x28] sm:$0xff]
        %v1699 = vld [vmem:[%s19 + $0x30] sm:$0xff]
        %v1700 = vld [vmem:[%s19 + $0x38] sm:$0xff]
        %v1701 = vld [vmem:[%s19 + $0x40] sm:$0xff]
        %v1702 = vld [vmem:[%s19 + $0x48] sm:$0xff]
        %v1703 = vld [vmem:[%s19 + $0x50] sm:$0xff]
        %v1704 = vld [vmem:[%s19 + $0x58] sm:$0xff]
        %v1705 = vld [vmem:[%s19 + $0x60] sm:$0xff]
        %v1706 = vld [vmem:[%s19 + $0x68] sm:$0xff]
        %v1707 = vld [vmem:[%s19 + $0x70] sm:$0xff]
        %v1708 = vld [vmem:[%s19 + $0x78] sm:$0xff]
        %v1709 = vld [vmem:[%s19 + $0x80] sm:$0xff]
        %v1710 = vld [vmem:[%s19 + $0x88] sm:$0xff]
        %v1711 = vld [vmem:[%s19 + $0x90] sm:$0xff]
        %v1712 = vld [vmem:[%s19 + $0x98] sm:$0xff]
        %v1713 = vld [vmem:[%s19 + $0xa0] sm:$0xff]
        %v1714 = vld [vmem:[%s19 + $0xa8] sm:$0xff]
        %v1715 = vld [vmem:[%s19 + $0xb0] sm:$0xff]
        %v1716 = vld [vmem:[%s19 + $0xb8] sm:$0xff]
        %v1717 = vld [vmem:[%s19 + $0xc0] sm:$0xff]
        %v1718 = vld [vmem:[%s19 + $0xc8] sm:$0xff]
        %v1720 = vsel %vm1590, %v1692, 0
        %1722 = vmatprep.subr.mxu0 0.0
        %1723 = vmatpush1.msra.mxu0 %v1693
        %1724 = vmatprep.subr.mxu0 0.0
        %1725 = vmatpush1.msra.mxu0 %v1694
        %1726 = vmatprep.subr.mxu0 0.0
        %1727 = vmatpush1.msra.mxu0 %v1695
        %1728 = vmatprep.subr.mxu0 0.0
        %1729 = vmatpush1.msra.mxu0 %v1696
        %1730 = vmatprep.subr.mxu0 0.0
        %1731 = vmatpush1.msra.mxu0 %v1697
        %1732 = vmatprep.subr.mxu0 0.0
        %1733 = vmatpush1.msra.mxu0 %v1698
        %1734 = vmatprep.subr.mxu0 0.0
        %1735 = vmatpush1.msra.mxu0 %v1699
        %1736 = vmatprep.subr.mxu0 0.0
        %1737 = vmatpush1.msra.mxu0 %v1700
        %1738 = vmatprep.subr.mxu0 0.0
        %1739 = vmatpush1.msra.mxu0 %v1701
        %1740 = vmatprep.subr.mxu0 0.0
        %1741 = vmatpush1.msra.mxu0 %v1702
        %1742 = vmatprep.subr.mxu0 0.0
        %1743 = vmatpush1.msra.mxu0 %v1703
        %1744 = vmatprep.subr.mxu0 0.0
        %1745 = vmatpush1.msra.mxu0 %v1704
        %1746 = vmatprep.subr.mxu0 0.0
        %1747 = vmatpush1.msra.mxu0 %v1705
        %1748 = vmatprep.subr.mxu0 0.0
        %1749 = vmatpush1.msra.mxu0 %v1706
        %1750 = vmatprep.subr.mxu0 0.0
        %1751 = vmatpush1.msra.mxu0 %v1707
        %1752 = vmatprep.subr.mxu0 0.0
        %1753 = vmatpush1.msra.mxu0 %v1708
        %1754 = vmatprep.subr.mxu0 0.0
        %1755 = vmatpush1.msra.mxu0 %v1709
        %1756 = vmatprep.subr.mxu0 0.0
        %1757 = vmatpush1.msra.mxu0 %v1710
        %1758 = vmatprep.subr.mxu0 0.0
        %1759 = vmatpush1.msra.mxu0 %v1711
        %1760 = vmatprep.subr.mxu0 0.0
        %1761 = vmatpush1.msra.mxu0 %v1712
        %1762 = vmatprep.subr.mxu0 0.0
        %1763 = vmatpush1.msra.mxu0 %v1713
        %1764 = vmatprep.subr.mxu0 0.0
        %1765 = vmatpush1.msra.mxu0 %v1714
        %1766 = vmatprep.subr.mxu0 0.0
        %1767 = vmatpush1.msra.mxu0 %v1715
        %1768 = vmatprep.subr.mxu0 0.0
        %1769 = vmatpush1.msra.mxu0 %v1716
        %1770 = vmatprep.subr.mxu0 0.0
        %1771 = vmatpush1.msra.mxu0 %v1717
        %1772 = vmatprep.subr.mxu0 0.0
        %1773 = vmatpush1.msra.mxu0 %v1718
        %1774 = vmatprep.subr.mxu0 0.0
        %1775 = vmatpush1.msra.mxu0 0.0
        %1776 = vmatprep.subr.mxu0 0.0
        %1777 = vmatpush1.msra.mxu0 0.0
        %1778 = vmatprep.subr.mxu0 0.0
        %1779 = vmatpush1.msra.mxu0 0.0
        %1780 = vmatprep.subr.mxu0 0.0
        %1781 = vmatpush1.msra.mxu0 0.0
        %1782 = vmatprep.subr.mxu0 0.0
        %1783 = vmatpush1.msra.mxu0 0.0
        %1784 = vmatprep.subr.mxu0 0.0
        %1785 = vmatpush1.msra.mxu0 0.0
        %1786 = vmatprep.mubr.f32.mxu0 %v1720
        %1787 = vmatmul.mubr.f32.gmra.mrb[0].mxu0 %v1691
        %v1788 = vpop.f32.mrb[0].mxu0
        %v1789 = vadd.f32 0.0, %v1788
        %v1790 = vpop.f32.mrb[0].mxu0
        %1791 = vdwg.mxu0
        %v1792 = vadd.f32 %v1665, %v1789
        %v1793 = vld [vmem:[%s20] sm:$0x1]
        %v1795 = vlaneseq
        %v1796 = vshrl.u32 %v1795, 7
        %v1797 = vsub.s32 0, %v1796
        %v1798 = vrot.slane %v1793, %v1797
        %v1800 = vadd.f32 %v1792, %v1798
        %1801 = vst [vmem:[%s768] sm:$0xff] %v1800
        %s1802 = sand.u32 %s515, 1
        %s1803 = scalar_lea.sflag [#allocation4], %s1802
        %s1804 = sand.u32 %s515, 1
        %s1805 = smul.addr %s1804, 8
        %s1806 = scalar_lea.vmem [#allocation8], %s1805
        // Predicated region
        $region117: #{tpu_custom_call.1} parent=103 // pred_check
          %p1807 = pneg %p525
        $region118: #{tpu_custom_call.1} parent=103 // pred_check_branch
          %1809 = sbr.rel (%p1807) target = $region120
        $region119: #{tpu_custom_call.1} parent=103 // pred_region
          %s1811 = ssub.s32 128, 128
          %1812 = vsyncadd %s1803, %s1811
          %s1813 = smul.addr %s41, 128
          %s1814 = scalar_lea.hbm %s21, %s1813
          %s1816 = sshll.u32 %s1806, 4
          %s1817 = int_to_ptr.vmem [resolvable:$true] %s1816
          %1819 = dma.vmem_to_hbm [thread:$0]  %s1817, 128, %s1814, %s1803
        $region120: #{tpu_custom_call.1} parent=103 // pred_fallthru
          _
      $region104: #{tpu_custom_call.1} parent=5 // pred_fallthru
        _
      %p1820 = scmp.le.s32.totalorder 2, %s36
      // Predicated region
      $region121: #{tpu_custom_call.1} parent=5 // pred_check
        %p1821 = pneg %p1820
      $region122: #{tpu_custom_call.1} parent=5 // pred_check_branch
        %1823 = sbr.rel (%p1821) target = $region124
      $region123: #{tpu_custom_call.1} parent=5 // pred_region
        %s1824 = ssub.s32 %s36, 2
        // Predicated region
        $region125: #{tpu_custom_call.1} parent=123 // pred_check
          %p1825 = pneg %p531
        $region126: #{tpu_custom_call.1} parent=123 // pred_check_branch
          %1827 = sbr.rel (%p1825) target = $region128
        $region127: #{tpu_custom_call.1} parent=123 // pred_region
          %s1828 = sand.u32 %s516, 1
          %s1829 = scalar_lea.sflag [#allocation4], %s1828
          %s1830 = sand.u32 %s516, 1
          %s1831 = smul.addr %s1830, 8
          %s1832 = scalar_lea.vmem [#allocation8], %s1831
          %1833 = dma.done %s1829, 128
        $region128: #{tpu_custom_call.1} parent=123 // pred_fallthru
          _
      $region124: #{tpu_custom_call.1} parent=5 // pred_fallthru
        _
    $region6: #{tpu_custom_call.1} parent=1 // loop_footer
      %s40 = sadd.s32 1, %s36
    $region7: #{tpu_custom_call.1} parent=1 // loop_footer_branch
      %35 = sbr.rel target = $region3
    $region8: #{tpu_custom_call.1} parent=1 // loop_exit
      _
    %1834 = vsyncpa [#allocation3], 1
    %s1835 = scalar_lea.sflag [#allocation3], 1
    %1836 = vsyncpa %s1835, 1
    %1837 = vsyncpa [#allocation6], 1
    %s1838 = scalar_lea.sflag [#allocation6], 1
    %1839 = vsyncpa %s1838, 1
    %1840 = vsyncpa [#allocation4], 1
    %s1841 = scalar_lea.sflag [#allocation4], 1
    %1842 = vsyncpa %s1841, 1

</llo_original>
